<compile_context>
chip_gen: v7x
topology: tpu7x:2x2x1
jax: 0.10.0
libtpu: 0.0.40
codegen_flags: <defaults>
</compile_context>

<pallas_src>
import functools

import jax
import jax.numpy as jnp
from jax import lax
from jax.experimental import pallas as pl
from jax.experimental.pallas import tpu as pltpu

HIDDEN = 32


def _round_up(a, m):
    return (a + m - 1) // m * m


def dnet_kernel(x_ref, wih_ref, whh_ref, b_ref, w1_ref, b1_ref, w2_ref, b2_ref, o_ref):
    # x_ref:   (TILE_B, T)  f32 input sequence (feature dim of size 1 squeezed), batch on sublanes
    # wih_ref: (1, 4H)      W_ih^T, i/f/o columns pre-scaled by 0.5 (input_size = 1)
    # whh_ref: (H, 4H)      W_hh^T, same pre-scale, bfloat16
    # b_ref:   (1, 4H)      b_ih + b_hh, same pre-scale
    # w1_ref:  (H, 10)      Linear(32,10) weight^T
    # b1_ref:  (1, 10)
    # w2_ref:  (10, 1)      Linear(10,1) weight^T
    # b2_ref:  (1, 1)
    # o_ref:   (TILE_B, 1)
    H = HIDDEN
    x = x_ref[...]                        # (Bt, T), batch on sublanes -> no relayout needed
    Bt, T = x.shape
    wih = wih_ref[...]                    # (1, 4H)  f32
    whh = whh_ref[...]                    # (H, 4H)  bf16 (pre-cast in wrapper)
    b = b_ref[...]                        # (1, 4H)  f32

    def step(x_col, h, c):
        # Pre-scaled gates: [a_i/2, a_f/2, a_g, a_o/2];  sigmoid(a) == 0.5*(tanh(a/2)+1).
        gates = x_col * wih + jnp.dot(h.astype(jnp.bfloat16), whh,
                                      preferred_element_type=jnp.float32) + b
        t = jnp.tanh(gates)               # single EUP pass over the full (Bt, 4H) slab
        t_i = t[:, 0 * H:1 * H]
        t_f = t[:, 1 * H:2 * H]
        t_g = t[:, 2 * H:3 * H]
        t_o = t[:, 3 * H:4 * H]
        # i = 0.5*(t_i+1), f = 0.5*(t_f+1), o = 0.5*(t_o+1), g = t_g  (PyTorch gate order).
        c_new = 0.5 * ((t_f + 1.0) * c + (t_i + 1.0) * t_g)
        h_new = (0.5 * (t_o + 1.0)) * jnp.tanh(c_new)
        return h_new, c_new

    h = jnp.zeros((Bt, H), jnp.float32)
    c = jnp.zeros((Bt, H), jnp.float32)
    if T <= 64:
        # Short static T: full unroll with compile-time lane slices of x (zero-cost views).
        for t in range(T):
            h, c = step(x[:, t:t + 1], h, c)
    else:
        # TODO(synk): long-T path uses a dynamic lane slice per step; if that shows up as
        # XLU rotates in the bundle, move to a T-chunk grid axis with h/c in VMEM scratch.
        def body(t, carry):
            hh, cc = carry
            return step(lax.dynamic_slice_in_dim(x, t, 1, axis=1), hh, cc)
        h, c = lax.fori_loop(0, T, body, (h, c), unroll=8)

    # TODO(synk): if profiling shows the gate-slice lane-rotates (offsets H/2H/3H) saturating
    # the XLU after the EUP cut, split the recurrent matmul into 4 lane-aligned (H,H) dots.
    hid = jnp.maximum(
        jnp.dot(h, w1_ref[...], preferred_element_type=jnp.float32) + b1_ref[...], 0.0)
    z = jnp.dot(hid, w2_ref[...], preferred_element_type=jnp.float32) + b2_ref[...]
    o_ref[...] = jax.nn.sigmoid(z)        # (Bt, 1); tiny masked store, acceptable per review


@functools.partial(jax.jit, static_argnames=("tile_b_cap",))
def dnet_forward(x, params, *, tile_b_cap=128):
    """x: (B, T, 1) float32 -> (B, 1) float32."""
    B, T, F = x.shape
    assert F == 1
    H = HIDDEN
    x2d = x.reshape(B, T).astype(jnp.float32)

    # Batch tile: multiple of 8 sublanes, capped (sweep tile_b_cap to 256-512 on v6e for
    # large B); aim for >= 2 grid steps so the "parallel" axis shards across both v7x
    # TensorCores (neutral on single-TC v5e/v6e).
    half = _round_up(max(1, (B + 1) // 2), 8)
    tile_b = max(8, min(tile_b_cap, half))
    B_pad = max(_round_up(B, tile_b), 2 * tile_b)
    if B_pad != B:
        x2d = jnp.pad(x2d, ((0, B_pad - B), (0, 0)))

    wih_t, whh_t, b_sum, w1_t, b1, w2_t, b2 = params

    # Fold the sigmoid 0.5 pre-scale into the i/f/o gate columns (exact), pre-cast W_hh to
    # bf16 once here (removes the per-grid-step cast and halves the weight DMA).
    gate_scale = jnp.concatenate([
        jnp.full((1, 2 * H), 0.5, jnp.float32),    # i, f
        jnp.ones((1, H), jnp.float32),             # g
        jnp.full((1, H), 0.5, jnp.float32),        # o
    ], axis=1)                                      # (1, 4H)
    wih_s = wih_t * gate_scale                      # (1, 4H)  f32
    whh_bf = (whh_t * gate_scale).astype(jnp.bfloat16)   # (H, 4H) bf16
    b_s = b_sum * gate_scale                        # (1, 4H)  f32

    grid = (B_pad // tile_b,)

    def full(shape):
        return pl.BlockSpec(shape, lambda i: (0,) * len(shape))

    # Advisory cost: single-tanh recurrence => ~5H transcendentals per element-step
    # (4H gate slab + H for tanh(c)), plus the tiny head sigmoid.
    flops = 2 * B_pad * T * H * 4 * H + B_pad * T * 4 * H + 2 * B_pad * (H * 10 + 10 * 1)
    transcendentals = 5 * H * B_pad * T + B_pad
    param_bytes = 4 * (4 * H + 4 * H + H * 10 + 10 + 10 + 1) + 2 * H * 4 * H
    bytes_accessed = 4 * (B_pad * T + B_pad) + param_bytes

    out = pl.pallas_call(
        dnet_kernel,
        out_shape=jax.ShapeDtypeStruct((B_pad, 1), jnp.float32),
        grid=grid,
        in_specs=[
            pl.BlockSpec((tile_b, T), lambda i: (i, 0)),   # x, batch-tiled, batch on sublanes
            full((1, 4 * H)),                              # W_ih^T (pre-scaled)
            full((H, 4 * H)),                              # W_hh^T (pre-scaled, bf16)
            full((1, 4 * H)),                              # b_ih + b_hh (pre-scaled)
            full((H, 10)),                                 # W1^T
            full((1, 10)),                                 # b1
            full((10, 1)),                                 # W2^T
            full((1, 1)),                                  # b2
        ],
        out_specs=pl.BlockSpec((tile_b, 1), lambda i: (i, 0)),
        compiler_params=pltpu.CompilerParams(
            dimension_semantics=("parallel",),
            vmem_limit_bytes=32 * 1024 * 1024,   # safe on v5e/v6e (128 MiB) and v7x (64 MiB)
        ),
        cost_estimate=pl.CostEstimate(
            flops=flops, transcendentals=transcendentals, bytes_accessed=bytes_accessed),
    )(x2d, wih_s, whh_bf, b_s, w1_t, b1, w2_t, b2)
    return out[:B]


def init_params(key):
    """Deterministic init mimicking PyTorch default U(-1/sqrt(H), 1/sqrt(H))."""
    H = HIDDEN
    k = 1.0 / jnp.sqrt(jnp.float32(H))
    keys = jax.random.split(key, 8)
    u = lambda kk, shape, bound: jax.random.uniform(kk, shape, jnp.float32, -bound, bound)

    w_ih = u(keys[0], (4 * H, 1), k)        # PyTorch shape (4H, input_size)
    w_hh = u(keys[1], (4 * H, H), k)        # (4H, H)
    b_ih = u(keys[2], (4 * H,), k)
    b_hh = u(keys[3], (4 * H,), k)

    k1 = 1.0 / jnp.sqrt(jnp.float32(H))
    w1 = u(keys[4], (10, H), k1)            # Linear(32,10)
    b1 = u(keys[5], (10,), k1)
    k2 = 1.0 / jnp.sqrt(jnp.float32(10))
    w2 = u(keys[6], (1, 10), k2)            # Linear(10,1)
    b2 = u(keys[7], (1,), k2)

    return (
        w_ih.T.reshape(1, 4 * H),           # (1, 4H)
        w_hh.T,                             # (H, 4H)
        (b_ih + b_hh).reshape(1, 4 * H),    # (1, 4H)
        w1.T,                               # (H, 10)
        b1.reshape(1, 10),
        w2.T,                               # (10, 1)
        b2.reshape(1, 1),
    )


def dnet_reference(x, params):
    """Pure-JAX reference (matches PyTorch LSTM + head semantics)."""
    wih_t, whh_t, b_sum, w1_t, b1, w2_t, b2 = params
    B, T, _ = x.shape
    xb = x.reshape(B, T).astype(jnp.float32)
    H = HIDDEN
    h = jnp.zeros((B, H), jnp.float32)
    c = jnp.zeros((B, H), jnp.float32)
    for t in range(T):
        g = xb[:, t:t + 1] * wih_t + h @ whh_t + b_sum
        i_g = jax.nn.sigmoid(g[:, 0 * H:1 * H])
        f_g = jax.nn.sigmoid(g[:, 1 * H:2 * H])
        g_g = jnp.tanh(g[:, 2 * H:3 * H])
        o_g = jax.nn.sigmoid(g[:, 3 * H:4 * H])
        c = f_g * c + i_g * g_g
        h = o_g * jnp.tanh(c)
    hid = jnp.maximum(h @ w1_t + b1, 0.0)
    return jax.nn.sigmoid(hid @ w2_t + b2)


if __name__ == "__main__":
    key = jax.random.PRNGKey(0)
    k_x, k_p = jax.random.split(key)

    B, T = 4, 8
    x = jax.random.normal(k_x, (B, T, 1), jnp.float32)   # (batch, seq, sample_num=1)
    params = init_params(k_p)

    out = dnet_forward(x, params)
    out = jax.block_until_ready(out)
    assert out.shape == (B, 1)
    assert bool(jnp.all((out >= 0.0) & (out <= 1.0)))

    ref = dnet_reference(x, params)
    err = float(jnp.max(jnp.abs(out - ref)))
    assert err < 2e-2, f"mismatch vs reference: {err}"
    print("KERNEL_OK")
</pallas_src>

<mosaic_0001>
module attributes {stable_mosaic.version = 11 : i64} {
  func.func @dnet_kernel(%arg0: i32, %arg1: memref<8x8xf32, #tpu.memory_space<vmem>>, %arg2: memref<1x128xf32, #tpu.memory_space<vmem>>, %arg3: memref<32x128xbf16, #tpu.memory_space<vmem>>, %arg4: memref<1x128xf32, #tpu.memory_space<vmem>>, %arg5: memref<32x10xf32, #tpu.memory_space<vmem>>, %arg6: memref<1x10xf32, #tpu.memory_space<vmem>>, %arg7: memref<10x1xf32, #tpu.memory_space<vmem>>, %arg8: memref<1x1xf32, #tpu.memory_space<vmem>>, %arg9: memref<8x1xf32, #tpu.memory_space<vmem>>) attributes {dimension_semantics = [#tpu.dimension_semantics<parallel>], iteration_bounds = array<i64: 2>, scalar_prefetch = 0 : i64, scratch_operands = 0 : i64, tpu.core_type = #tpu.core_type<tc>, window_params = [{transform_indices = @transform_0, window_bounds = array<i64: 8, 8>}, {pipeline_mode = #tpu.pipeline_mode<synchronous>, transform_indices = @transform_1, window_bounds = array<i64: 1, 128>}, {pipeline_mode = #tpu.pipeline_mode<synchronous>, transform_indices = @transform_2, window_bounds = array<i64: 32, 128>}, {pipeline_mode = #tpu.pipeline_mode<synchronous>, transform_indices = @transform_3, window_bounds = array<i64: 1, 128>}, {pipeline_mode = #tpu.pipeline_mode<synchronous>, transform_indices = @transform_4, window_bounds = array<i64: 32, 10>}, {pipeline_mode = #tpu.pipeline_mode<synchronous>, transform_indices = @transform_5, window_bounds = array<i64: 1, 10>}, {pipeline_mode = #tpu.pipeline_mode<synchronous>, transform_indices = @transform_6, window_bounds = array<i64: 10, 1>}, {pipeline_mode = #tpu.pipeline_mode<synchronous>, transform_indices = @transform_7, window_bounds = array<i64: 1, 1>}, {transform_indices = @transform_8, window_bounds = array<i64: 8, 1>}]} {
    %c0 = arith.constant 0 : index
    %c0_0 = arith.constant 0 : index
    %0 = vector.load %arg1[%c0, %c0_0] : memref<8x8xf32, #tpu.memory_space<vmem>>, vector<8x8xf32>
    %c0_1 = arith.constant 0 : index
    %c0_2 = arith.constant 0 : index
    %1 = vector.load %arg2[%c0_1, %c0_2] : memref<1x128xf32, #tpu.memory_space<vmem>>, vector<1x128xf32>
    %c0_3 = arith.constant 0 : index
    %c0_4 = arith.constant 0 : index
    %2 = vector.load %arg3[%c0_3, %c0_4] : memref<32x128xbf16, #tpu.memory_space<vmem>>, vector<32x128xbf16>
    %c0_5 = arith.constant 0 : index
    %c0_6 = arith.constant 0 : index
    %3 = vector.load %arg4[%c0_5, %c0_6] : memref<1x128xf32, #tpu.memory_space<vmem>>, vector<1x128xf32>
    %cst = arith.constant 0.000000e+00 : f32
    %4 = vector.broadcast %cst : f32 to vector<8x32xf32>
    %cst_7 = arith.constant 0.000000e+00 : f32
    %5 = vector.broadcast %cst_7 : f32 to vector<8x32xf32>
    %6 = vector.extract_strided_slice %0 {offsets = [0, 0], sizes = [8, 1], strides = [1, 1]} : vector<8x8xf32> to vector<8x1xf32>
    %7 = vector.broadcast %6 : vector<8x1xf32> to vector<8x128xf32>
    %8 = vector.broadcast %1 : vector<1x128xf32> to vector<8x128xf32>
    %9 = arith.mulf %7, %8 : vector<8x128xf32>
    %10 = arith.truncf %4 : vector<8x32xf32> to vector<8x32xbf16>
    %cst_8 = arith.constant dense<0.000000e+00> : vector<8x128xf32>
    %11 = tpu.matmul %10, %2, %cst_8 {dimension_numbers = #tpu.dot_dimension_numbers<[1], [0], [0], [1], [0, 0, 1, 1], [], []>} : vector<8x32xbf16>, vector<32x128xbf16>, vector<8x128xf32> -> vector<8x128xf32>
    %12 = arith.addf %9, %11 : vector<8x128xf32>
    %13 = vector.broadcast %3 : vector<1x128xf32> to vector<8x128xf32>
    %14 = arith.addf %12, %13 : vector<8x128xf32>
    %15 = math.tanh %14 : vector<8x128xf32>
    %16 = vector.extract_strided_slice %15 {offsets = [0, 0], sizes = [8, 32], strides = [1, 1]} : vector<8x128xf32> to vector<8x32xf32>
    %17 = vector.extract_strided_slice %15 {offsets = [0, 32], sizes = [8, 32], strides = [1, 1]} : vector<8x128xf32> to vector<8x32xf32>
    %18 = vector.extract_strided_slice %15 {offsets = [0, 64], sizes = [8, 32], strides = [1, 1]} : vector<8x128xf32> to vector<8x32xf32>
    %19 = vector.extract_strided_slice %15 {offsets = [0, 96], sizes = [8, 32], strides = [1, 1]} : vector<8x128xf32> to vector<8x32xf32>
    %cst_9 = arith.constant 1.000000e+00 : f32
    %20 = vector.broadcast %cst_9 : f32 to vector<8x32xf32>
    %21 = arith.addf %17, %20 : vector<8x32xf32>
    %22 = arith.mulf %21, %5 : vector<8x32xf32>
    %cst_10 = arith.constant 1.000000e+00 : f32
    %23 = vector.broadcast %cst_10 : f32 to vector<8x32xf32>
    %24 = arith.addf %16, %23 : vector<8x32xf32>
    %25 = arith.mulf %24, %18 : vector<8x32xf32>
    %26 = arith.addf %22, %25 : vector<8x32xf32>
    %cst_11 = arith.constant 5.000000e-01 : f32
    %27 = vector.broadcast %cst_11 : f32 to vector<8x32xf32>
    %28 = arith.mulf %27, %26 : vector<8x32xf32>
    %cst_12 = arith.constant 1.000000e+00 : f32
    %29 = vector.broadcast %cst_12 : f32 to vector<8x32xf32>
    %30 = arith.addf %19, %29 : vector<8x32xf32>
    %cst_13 = arith.constant 5.000000e-01 : f32
    %31 = vector.broadcast %cst_13 : f32 to vector<8x32xf32>
    %32 = arith.mulf %31, %30 : vector<8x32xf32>
    %33 = math.tanh %28 : vector<8x32xf32>
    %34 = arith.mulf %32, %33 : vector<8x32xf32>
    %35 = vector.extract_strided_slice %0 {offsets = [0, 1], sizes = [8, 1], strides = [1, 1]} : vector<8x8xf32> to vector<8x1xf32>
    %36 = vector.broadcast %35 : vector<8x1xf32> to vector<8x128xf32>
    %37 = vector.broadcast %1 : vector<1x128xf32> to vector<8x128xf32>
    %38 = arith.mulf %36, %37 : vector<8x128xf32>
    %39 = arith.truncf %34 : vector<8x32xf32> to vector<8x32xbf16>
    %cst_14 = arith.constant dense<0.000000e+00> : vector<8x128xf32>
    %40 = tpu.matmul %39, %2, %cst_14 {dimension_numbers = #tpu.dot_dimension_numbers<[1], [0], [0], [1], [0, 0, 1, 1], [], []>} : vector<8x32xbf16>, vector<32x128xbf16>, vector<8x128xf32> -> vector<8x128xf32>
    %41 = arith.addf %38, %40 : vector<8x128xf32>
    %42 = vector.broadcast %3 : vector<1x128xf32> to vector<8x128xf32>
    %43 = arith.addf %41, %42 : vector<8x128xf32>
    %44 = math.tanh %43 : vector<8x128xf32>
    %45 = vector.extract_strided_slice %44 {offsets = [0, 0], sizes = [8, 32], strides = [1, 1]} : vector<8x128xf32> to vector<8x32xf32>
    %46 = vector.extract_strided_slice %44 {offsets = [0, 32], sizes = [8, 32], strides = [1, 1]} : vector<8x128xf32> to vector<8x32xf32>
    %47 = vector.extract_strided_slice %44 {offsets = [0, 64], sizes = [8, 32], strides = [1, 1]} : vector<8x128xf32> to vector<8x32xf32>
    %48 = vector.extract_strided_slice %44 {offsets = [0, 96], sizes = [8, 32], strides = [1, 1]} : vector<8x128xf32> to vector<8x32xf32>
    %cst_15 = arith.constant 1.000000e+00 : f32
    %49 = vector.broadcast %cst_15 : f32 to vector<8x32xf32>
    %50 = arith.addf %46, %49 : vector<8x32xf32>
    %51 = arith.mulf %50, %28 : vector<8x32xf32>
    %cst_16 = arith.constant 1.000000e+00 : f32
    %52 = vector.broadcast %cst_16 : f32 to vector<8x32xf32>
    %53 = arith.addf %45, %52 : vector<8x32xf32>
    %54 = arith.mulf %53, %47 : vector<8x32xf32>
    %55 = arith.addf %51, %54 : vector<8x32xf32>
    %cst_17 = arith.constant 5.000000e-01 : f32
    %56 = vector.broadcast %cst_17 : f32 to vector<8x32xf32>
    %57 = arith.mulf %56, %55 : vector<8x32xf32>
    %cst_18 = arith.constant 1.000000e+00 : f32
    %58 = vector.broadcast %cst_18 : f32 to vector<8x32xf32>
    %59 = arith.addf %48, %58 : vector<8x32xf32>
    %cst_19 = arith.constant 5.000000e-01 : f32
    %60 = vector.broadcast %cst_19 : f32 to vector<8x32xf32>
    %61 = arith.mulf %60, %59 : vector<8x32xf32>
    %62 = math.tanh %57 : vector<8x32xf32>
    %63 = arith.mulf %61, %62 : vector<8x32xf32>
    %64 = vector.extract_strided_slice %0 {offsets = [0, 2], sizes = [8, 1], strides = [1, 1]} : vector<8x8xf32> to vector<8x1xf32>
    %65 = vector.broadcast %64 : vector<8x1xf32> to vector<8x128xf32>
    %66 = vector.broadcast %1 : vector<1x128xf32> to vector<8x128xf32>
    %67 = arith.mulf %65, %66 : vector<8x128xf32>
    %68 = arith.truncf %63 : vector<8x32xf32> to vector<8x32xbf16>
    %cst_20 = arith.constant dense<0.000000e+00> : vector<8x128xf32>
    %69 = tpu.matmul %68, %2, %cst_20 {dimension_numbers = #tpu.dot_dimension_numbers<[1], [0], [0], [1], [0, 0, 1, 1], [], []>} : vector<8x32xbf16>, vector<32x128xbf16>, vector<8x128xf32> -> vector<8x128xf32>
    %70 = arith.addf %67, %69 : vector<8x128xf32>
    %71 = vector.broadcast %3 : vector<1x128xf32> to vector<8x128xf32>
    %72 = arith.addf %70, %71 : vector<8x128xf32>
    %73 = math.tanh %72 : vector<8x128xf32>
    %74 = vector.extract_strided_slice %73 {offsets = [0, 0], sizes = [8, 32], strides = [1, 1]} : vector<8x128xf32> to vector<8x32xf32>
    %75 = vector.extract_strided_slice %73 {offsets = [0, 32], sizes = [8, 32], strides = [1, 1]} : vector<8x128xf32> to vector<8x32xf32>
    %76 = vector.extract_strided_slice %73 {offsets = [0, 64], sizes = [8, 32], strides = [1, 1]} : vector<8x128xf32> to vector<8x32xf32>
    %77 = vector.extract_strided_slice %73 {offsets = [0, 96], sizes = [8, 32], strides = [1, 1]} : vector<8x128xf32> to vector<8x32xf32>
    %cst_21 = arith.constant 1.000000e+00 : f32
    %78 = vector.broadcast %cst_21 : f32 to vector<8x32xf32>
    %79 = arith.addf %75, %78 : vector<8x32xf32>
    %80 = arith.mulf %79, %57 : vector<8x32xf32>
    %cst_22 = arith.constant 1.000000e+00 : f32
    %81 = vector.broadcast %cst_22 : f32 to vector<8x32xf32>
    %82 = arith.addf %74, %81 : vector<8x32xf32>
    %83 = arith.mulf %82, %76 : vector<8x32xf32>
    %84 = arith.addf %80, %83 : vector<8x32xf32>
    %cst_23 = arith.constant 5.000000e-01 : f32
    %85 = vector.broadcast %cst_23 : f32 to vector<8x32xf32>
    %86 = arith.mulf %85, %84 : vector<8x32xf32>
    %cst_24 = arith.constant 1.000000e+00 : f32
    %87 = vector.broadcast %cst_24 : f32 to vector<8x32xf32>
    %88 = arith.addf %77, %87 : vector<8x32xf32>
    %cst_25 = arith.constant 5.000000e-01 : f32
    %89 = vector.broadcast %cst_25 : f32 to vector<8x32xf32>
    %90 = arith.mulf %89, %88 : vector<8x32xf32>
    %91 = math.tanh %86 : vector<8x32xf32>
    %92 = arith.mulf %90, %91 : vector<8x32xf32>
    %93 = vector.extract_strided_slice %0 {offsets = [0, 3], sizes = [8, 1], strides = [1, 1]} : vector<8x8xf32> to vector<8x1xf32>
    %94 = vector.broadcast %93 : vector<8x1xf32> to vector<8x128xf32>
    %95 = vector.broadcast %1 : vector<1x128xf32> to vector<8x128xf32>
    %96 = arith.mulf %94, %95 : vector<8x128xf32>
    %97 = arith.truncf %92 : vector<8x32xf32> to vector<8x32xbf16>
    %cst_26 = arith.constant dense<0.000000e+00> : vector<8x128xf32>
    %98 = tpu.matmul %97, %2, %cst_26 {dimension_numbers = #tpu.dot_dimension_numbers<[1], [0], [0], [1], [0, 0, 1, 1], [], []>} : vector<8x32xbf16>, vector<32x128xbf16>, vector<8x128xf32> -> vector<8x128xf32>
    %99 = arith.addf %96, %98 : vector<8x128xf32>
    %100 = vector.broadcast %3 : vector<1x128xf32> to vector<8x128xf32>
    %101 = arith.addf %99, %100 : vector<8x128xf32>
    %102 = math.tanh %101 : vector<8x128xf32>
    %103 = vector.extract_strided_slice %102 {offsets = [0, 0], sizes = [8, 32], strides = [1, 1]} : vector<8x128xf32> to vector<8x32xf32>
    %104 = vector.extract_strided_slice %102 {offsets = [0, 32], sizes = [8, 32], strides = [1, 1]} : vector<8x128xf32> to vector<8x32xf32>
    %105 = vector.extract_strided_slice %102 {offsets = [0, 64], sizes = [8, 32], strides = [1, 1]} : vector<8x128xf32> to vector<8x32xf32>
    %106 = vector.extract_strided_slice %102 {offsets = [0, 96], sizes = [8, 32], strides = [1, 1]} : vector<8x128xf32> to vector<8x32xf32>
    %cst_27 = arith.constant 1.000000e+00 : f32
    %107 = vector.broadcast %cst_27 : f32 to vector<8x32xf32>
    %108 = arith.addf %104, %107 : vector<8x32xf32>
    %109 = arith.mulf %108, %86 : vector<8x32xf32>
    %cst_28 = arith.constant 1.000000e+00 : f32
    %110 = vector.broadcast %cst_28 : f32 to vector<8x32xf32>
    %111 = arith.addf %103, %110 : vector<8x32xf32>
    %112 = arith.mulf %111, %105 : vector<8x32xf32>
    %113 = arith.addf %109, %112 : vector<8x32xf32>
    %cst_29 = arith.constant 5.000000e-01 : f32
    %114 = vector.broadcast %cst_29 : f32 to vector<8x32xf32>
    %115 = arith.mulf %114, %113 : vector<8x32xf32>
    %cst_30 = arith.constant 1.000000e+00 : f32
    %116 = vector.broadcast %cst_30 : f32 to vector<8x32xf32>
    %117 = arith.addf %106, %116 : vector<8x32xf32>
    %cst_31 = arith.constant 5.000000e-01 : f32
    %118 = vector.broadcast %cst_31 : f32 to vector<8x32xf32>
    %119 = arith.mulf %118, %117 : vector<8x32xf32>
    %120 = math.tanh %115 : vector<8x32xf32>
    %121 = arith.mulf %119, %120 : vector<8x32xf32>
    %122 = vector.extract_strided_slice %0 {offsets = [0, 4], sizes = [8, 1], strides = [1, 1]} : vector<8x8xf32> to vector<8x1xf32>
    %123 = vector.broadcast %122 : vector<8x1xf32> to vector<8x128xf32>
    %124 = vector.broadcast %1 : vector<1x128xf32> to vector<8x128xf32>
    %125 = arith.mulf %123, %124 : vector<8x128xf32>
    %126 = arith.truncf %121 : vector<8x32xf32> to vector<8x32xbf16>
    %cst_32 = arith.constant dense<0.000000e+00> : vector<8x128xf32>
    %127 = tpu.matmul %126, %2, %cst_32 {dimension_numbers = #tpu.dot_dimension_numbers<[1], [0], [0], [1], [0, 0, 1, 1], [], []>} : vector<8x32xbf16>, vector<32x128xbf16>, vector<8x128xf32> -> vector<8x128xf32>
    %128 = arith.addf %125, %127 : vector<8x128xf32>
    %129 = vector.broadcast %3 : vector<1x128xf32> to vector<8x128xf32>
    %130 = arith.addf %128, %129 : vector<8x128xf32>
    %131 = math.tanh %130 : vector<8x128xf32>
    %132 = vector.extract_strided_slice %131 {offsets = [0, 0], sizes = [8, 32], strides = [1, 1]} : vector<8x128xf32> to vector<8x32xf32>
    %133 = vector.extract_strided_slice %131 {offsets = [0, 32], sizes = [8, 32], strides = [1, 1]} : vector<8x128xf32> to vector<8x32xf32>
    %134 = vector.extract_strided_slice %131 {offsets = [0, 64], sizes = [8, 32], strides = [1, 1]} : vector<8x128xf32> to vector<8x32xf32>
    %135 = vector.extract_strided_slice %131 {offsets = [0, 96], sizes = [8, 32], strides = [1, 1]} : vector<8x128xf32> to vector<8x32xf32>
    %cst_33 = arith.constant 1.000000e+00 : f32
    %136 = vector.broadcast %cst_33 : f32 to vector<8x32xf32>
    %137 = arith.addf %133, %136 : vector<8x32xf32>
    %138 = arith.mulf %137, %115 : vector<8x32xf32>
    %cst_34 = arith.constant 1.000000e+00 : f32
    %139 = vector.broadcast %cst_34 : f32 to vector<8x32xf32>
    %140 = arith.addf %132, %139 : vector<8x32xf32>
    %141 = arith.mulf %140, %134 : vector<8x32xf32>
    %142 = arith.addf %138, %141 : vector<8x32xf32>
    %cst_35 = arith.constant 5.000000e-01 : f32
    %143 = vector.broadcast %cst_35 : f32 to vector<8x32xf32>
    %144 = arith.mulf %143, %142 : vector<8x32xf32>
    %cst_36 = arith.constant 1.000000e+00 : f32
    %145 = vector.broadcast %cst_36 : f32 to vector<8x32xf32>
    %146 = arith.addf %135, %145 : vector<8x32xf32>
    %cst_37 = arith.constant 5.000000e-01 : f32
    %147 = vector.broadcast %cst_37 : f32 to vector<8x32xf32>
    %148 = arith.mulf %147, %146 : vector<8x32xf32>
    %149 = math.tanh %144 : vector<8x32xf32>
    %150 = arith.mulf %148, %149 : vector<8x32xf32>
    %151 = vector.extract_strided_slice %0 {offsets = [0, 5], sizes = [8, 1], strides = [1, 1]} : vector<8x8xf32> to vector<8x1xf32>
    %152 = vector.broadcast %151 : vector<8x1xf32> to vector<8x128xf32>
    %153 = vector.broadcast %1 : vector<1x128xf32> to vector<8x128xf32>
    %154 = arith.mulf %152, %153 : vector<8x128xf32>
    %155 = arith.truncf %150 : vector<8x32xf32> to vector<8x32xbf16>
    %cst_38 = arith.constant dense<0.000000e+00> : vector<8x128xf32>
    %156 = tpu.matmul %155, %2, %cst_38 {dimension_numbers = #tpu.dot_dimension_numbers<[1], [0], [0], [1], [0, 0, 1, 1], [], []>} : vector<8x32xbf16>, vector<32x128xbf16>, vector<8x128xf32> -> vector<8x128xf32>
    %157 = arith.addf %154, %156 : vector<8x128xf32>
    %158 = vector.broadcast %3 : vector<1x128xf32> to vector<8x128xf32>
    %159 = arith.addf %157, %158 : vector<8x128xf32>
    %160 = math.tanh %159 : vector<8x128xf32>
    %161 = vector.extract_strided_slice %160 {offsets = [0, 0], sizes = [8, 32], strides = [1, 1]} : vector<8x128xf32> to vector<8x32xf32>
    %162 = vector.extract_strided_slice %160 {offsets = [0, 32], sizes = [8, 32], strides = [1, 1]} : vector<8x128xf32> to vector<8x32xf32>
    %163 = vector.extract_strided_slice %160 {offsets = [0, 64], sizes = [8, 32], strides = [1, 1]} : vector<8x128xf32> to vector<8x32xf32>
    %164 = vector.extract_strided_slice %160 {offsets = [0, 96], sizes = [8, 32], strides = [1, 1]} : vector<8x128xf32> to vector<8x32xf32>
    %cst_39 = arith.constant 1.000000e+00 : f32
    %165 = vector.broadcast %cst_39 : f32 to vector<8x32xf32>
    %166 = arith.addf %162, %165 : vector<8x32xf32>
    %167 = arith.mulf %166, %144 : vector<8x32xf32>
    %cst_40 = arith.constant 1.000000e+00 : f32
    %168 = vector.broadcast %cst_40 : f32 to vector<8x32xf32>
    %169 = arith.addf %161, %168 : vector<8x32xf32>
    %170 = arith.mulf %169, %163 : vector<8x32xf32>
    %171 = arith.addf %167, %170 : vector<8x32xf32>
    %cst_41 = arith.constant 5.000000e-01 : f32
    %172 = vector.broadcast %cst_41 : f32 to vector<8x32xf32>
    %173 = arith.mulf %172, %171 : vector<8x32xf32>
    %cst_42 = arith.constant 1.000000e+00 : f32
    %174 = vector.broadcast %cst_42 : f32 to vector<8x32xf32>
    %175 = arith.addf %164, %174 : vector<8x32xf32>
    %cst_43 = arith.constant 5.000000e-01 : f32
    %176 = vector.broadcast %cst_43 : f32 to vector<8x32xf32>
    %177 = arith.mulf %176, %175 : vector<8x32xf32>
    %178 = math.tanh %173 : vector<8x32xf32>
    %179 = arith.mulf %177, %178 : vector<8x32xf32>
    %180 = vector.extract_strided_slice %0 {offsets = [0, 6], sizes = [8, 1], strides = [1, 1]} : vector<8x8xf32> to vector<8x1xf32>
    %181 = vector.broadcast %180 : vector<8x1xf32> to vector<8x128xf32>
    %182 = vector.broadcast %1 : vector<1x128xf32> to vector<8x128xf32>
    %183 = arith.mulf %181, %182 : vector<8x128xf32>
    %184 = arith.truncf %179 : vector<8x32xf32> to vector<8x32xbf16>
    %cst_44 = arith.constant dense<0.000000e+00> : vector<8x128xf32>
    %185 = tpu.matmul %184, %2, %cst_44 {dimension_numbers = #tpu.dot_dimension_numbers<[1], [0], [0], [1], [0, 0, 1, 1], [], []>} : vector<8x32xbf16>, vector<32x128xbf16>, vector<8x128xf32> -> vector<8x128xf32>
    %186 = arith.addf %183, %185 : vector<8x128xf32>
    %187 = vector.broadcast %3 : vector<1x128xf32> to vector<8x128xf32>
    %188 = arith.addf %186, %187 : vector<8x128xf32>
    %189 = math.tanh %188 : vector<8x128xf32>
    %190 = vector.extract_strided_slice %189 {offsets = [0, 0], sizes = [8, 32], strides = [1, 1]} : vector<8x128xf32> to vector<8x32xf32>
    %191 = vector.extract_strided_slice %189 {offsets = [0, 32], sizes = [8, 32], strides = [1, 1]} : vector<8x128xf32> to vector<8x32xf32>
    %192 = vector.extract_strided_slice %189 {offsets = [0, 64], sizes = [8, 32], strides = [1, 1]} : vector<8x128xf32> to vector<8x32xf32>
    %193 = vector.extract_strided_slice %189 {offsets = [0, 96], sizes = [8, 32], strides = [1, 1]} : vector<8x128xf32> to vector<8x32xf32>
    %cst_45 = arith.constant 1.000000e+00 : f32
    %194 = vector.broadcast %cst_45 : f32 to vector<8x32xf32>
    %195 = arith.addf %191, %194 : vector<8x32xf32>
    %196 = arith.mulf %195, %173 : vector<8x32xf32>
    %cst_46 = arith.constant 1.000000e+00 : f32
    %197 = vector.broadcast %cst_46 : f32 to vector<8x32xf32>
    %198 = arith.addf %190, %197 : vector<8x32xf32>
    %199 = arith.mulf %198, %192 : vector<8x32xf32>
    %200 = arith.addf %196, %199 : vector<8x32xf32>
    %cst_47 = arith.constant 5.000000e-01 : f32
    %201 = vector.broadcast %cst_47 : f32 to vector<8x32xf32>
    %202 = arith.mulf %201, %200 : vector<8x32xf32>
    %cst_48 = arith.constant 1.000000e+00 : f32
    %203 = vector.broadcast %cst_48 : f32 to vector<8x32xf32>
    %204 = arith.addf %193, %203 : vector<8x32xf32>
    %cst_49 = arith.constant 5.000000e-01 : f32
    %205 = vector.broadcast %cst_49 : f32 to vector<8x32xf32>
    %206 = arith.mulf %205, %204 : vector<8x32xf32>
    %207 = math.tanh %202 : vector<8x32xf32>
    %208 = arith.mulf %206, %207 : vector<8x32xf32>
    %209 = vector.extract_strided_slice %0 {offsets = [0, 7], sizes = [8, 1], strides = [1, 1]} : vector<8x8xf32> to vector<8x1xf32>
    %210 = vector.broadcast %209 : vector<8x1xf32> to vector<8x128xf32>
    %211 = vector.broadcast %1 : vector<1x128xf32> to vector<8x128xf32>
    %212 = arith.mulf %210, %211 : vector<8x128xf32>
    %213 = arith.truncf %208 : vector<8x32xf32> to vector<8x32xbf16>
    %cst_50 = arith.constant dense<0.000000e+00> : vector<8x128xf32>
    %214 = tpu.matmul %213, %2, %cst_50 {dimension_numbers = #tpu.dot_dimension_numbers<[1], [0], [0], [1], [0, 0, 1, 1], [], []>} : vector<8x32xbf16>, vector<32x128xbf16>, vector<8x128xf32> -> vector<8x128xf32>
    %215 = arith.addf %212, %214 : vector<8x128xf32>
    %216 = vector.broadcast %3 : vector<1x128xf32> to vector<8x128xf32>
    %217 = arith.addf %215, %216 : vector<8x128xf32>
    %218 = math.tanh %217 : vector<8x128xf32>
    %219 = vector.extract_strided_slice %218 {offsets = [0, 0], sizes = [8, 32], strides = [1, 1]} : vector<8x128xf32> to vector<8x32xf32>
    %220 = vector.extract_strided_slice %218 {offsets = [0, 32], sizes = [8, 32], strides = [1, 1]} : vector<8x128xf32> to vector<8x32xf32>
    %221 = vector.extract_strided_slice %218 {offsets = [0, 64], sizes = [8, 32], strides = [1, 1]} : vector<8x128xf32> to vector<8x32xf32>
    %222 = vector.extract_strided_slice %218 {offsets = [0, 96], sizes = [8, 32], strides = [1, 1]} : vector<8x128xf32> to vector<8x32xf32>
    %cst_51 = arith.constant 1.000000e+00 : f32
    %223 = vector.broadcast %cst_51 : f32 to vector<8x32xf32>
    %224 = arith.addf %220, %223 : vector<8x32xf32>
    %225 = arith.mulf %224, %202 : vector<8x32xf32>
    %cst_52 = arith.constant 1.000000e+00 : f32
    %226 = vector.broadcast %cst_52 : f32 to vector<8x32xf32>
    %227 = arith.addf %219, %226 : vector<8x32xf32>
    %228 = arith.mulf %227, %221 : vector<8x32xf32>
    %229 = arith.addf %225, %228 : vector<8x32xf32>
    %cst_53 = arith.constant 5.000000e-01 : f32
    %230 = vector.broadcast %cst_53 : f32 to vector<8x32xf32>
    %231 = arith.mulf %230, %229 : vector<8x32xf32>
    %cst_54 = arith.constant 1.000000e+00 : f32
    %232 = vector.broadcast %cst_54 : f32 to vector<8x32xf32>
    %233 = arith.addf %222, %232 : vector<8x32xf32>
    %cst_55 = arith.constant 5.000000e-01 : f32
    %234 = vector.broadcast %cst_55 : f32 to vector<8x32xf32>
    %235 = arith.mulf %234, %233 : vector<8x32xf32>
    %236 = math.tanh %231 : vector<8x32xf32>
    %237 = arith.mulf %235, %236 : vector<8x32xf32>
    %c0_56 = arith.constant 0 : index
    %c0_57 = arith.constant 0 : index
    %238 = vector.load %arg5[%c0_56, %c0_57] : memref<32x10xf32, #tpu.memory_space<vmem>>, vector<32x10xf32>
    %cst_58 = arith.constant dense<0.000000e+00> : vector<8x10xf32>
    %239 = tpu.matmul %237, %238, %cst_58 {dimension_numbers = #tpu.dot_dimension_numbers<[1], [0], [0], [1], [0, 0, 1, 1], [], []>} : vector<8x32xf32>, vector<32x10xf32>, vector<8x10xf32> -> vector<8x10xf32>
    %c0_59 = arith.constant 0 : index
    %c0_60 = arith.constant 0 : index
    %240 = vector.load %arg6[%c0_59, %c0_60] : memref<1x10xf32, #tpu.memory_space<vmem>>, vector<1x10xf32>
    %241 = vector.broadcast %240 : vector<1x10xf32> to vector<8x10xf32>
    %242 = arith.addf %239, %241 : vector<8x10xf32>
    %cst_61 = arith.constant 0.000000e+00 : f32
    %243 = vector.broadcast %cst_61 : f32 to vector<8x10xf32>
    %244 = arith.maximumf %242, %243 : vector<8x10xf32>
    %c0_62 = arith.constant 0 : index
    %c0_63 = arith.constant 0 : index
    %245 = vector.load %arg7[%c0_62, %c0_63] : memref<10x1xf32, #tpu.memory_space<vmem>>, vector<10x1xf32>
    %cst_64 = arith.constant dense<0.000000e+00> : vector<8x1xf32>
    %246 = tpu.matmul %244, %245, %cst_64 {dimension_numbers = #tpu.dot_dimension_numbers<[1], [0], [0], [1], [0, 0, 1, 1], [], []>} : vector<8x10xf32>, vector<10x1xf32>, vector<8x1xf32> -> vector<8x1xf32>
    %c0_65 = arith.constant 0 : index
    %c0_66 = arith.constant 0 : index
    %247 = vector.load %arg8[%c0_65, %c0_66] : memref<1x1xf32, #tpu.memory_space<vmem>>, vector<1x1xf32>
    %248 = vector.broadcast %247 : vector<1x1xf32> to vector<8x1xf32>
    %249 = arith.addf %246, %248 : vector<8x1xf32>
    %250 = arith.negf %249 : vector<8x1xf32>
    %251 = math.exp %250 : vector<8x1xf32>
    %cst_67 = arith.constant 1.000000e+00 : f32
    %252 = vector.broadcast %cst_67 : f32 to vector<8x1xf32>
    %253 = arith.addf %252, %251 : vector<8x1xf32>
    %254 = arith.divf %252, %253 : vector<8x1xf32>
    %c0_68 = arith.constant 0 : index
    %c0_69 = arith.constant 0 : index
    %255 = vector.load %arg9[%c0_68, %c0_69] : memref<8x1xf32, #tpu.memory_space<vmem>>, vector<8x1xf32>
    tpu.vector_store %arg9[%c0_68, %c0_69], %254 {strides = array<i32>} : memref<8x1xf32, #tpu.memory_space<vmem>>, vector<8x1xf32>,
    return
  }
  func.func @transform_0(%arg0: i32) -> (i32, i32) {
    %c0_i32 = arith.constant 0 : i32
    %c0_i32_0 = arith.constant 0 : i32
    return %arg0, %c0_i32 : i32, i32
  }
  func.func @transform_1(%arg0: i32) -> (i32, i32) {
    %c0_i32 = arith.constant 0 : i32
    %c0_i32_0 = arith.constant 0 : i32
    %c0_i32_1 = arith.constant 0 : i32
    return %c0_i32, %c0_i32_0 : i32, i32
  }
  func.func @transform_2(%arg0: i32) -> (i32, i32) {
    %c0_i32 = arith.constant 0 : i32
    %c0_i32_0 = arith.constant 0 : i32
    %c0_i32_1 = arith.constant 0 : i32
    return %c0_i32, %c0_i32_0 : i32, i32
  }
  func.func @transform_3(%arg0: i32) -> (i32, i32) {
    %c0_i32 = arith.constant 0 : i32
    %c0_i32_0 = arith.constant 0 : i32
    %c0_i32_1 = arith.constant 0 : i32
    return %c0_i32, %c0_i32_0 : i32, i32
  }
  func.func @transform_4(%arg0: i32) -> (i32, i32) {
    %c0_i32 = arith.constant 0 : i32
    %c0_i32_0 = arith.constant 0 : i32
    %c0_i32_1 = arith.constant 0 : i32
    return %c0_i32, %c0_i32_0 : i32, i32
  }
  func.func @transform_5(%arg0: i32) -> (i32, i32) {
    %c0_i32 = arith.constant 0 : i32
    %c0_i32_0 = arith.constant 0 : i32
    %c0_i32_1 = arith.constant 0 : i32
    return %c0_i32, %c0_i32_0 : i32, i32
  }
  func.func @transform_6(%arg0: i32) -> (i32, i32) {
    %c0_i32 = arith.constant 0 : i32
    %c0_i32_0 = arith.constant 0 : i32
    %c0_i32_1 = arith.constant 0 : i32
    return %c0_i32, %c0_i32_0 : i32, i32
  }
  func.func @transform_7(%arg0: i32) -> (i32, i32) {
    %c0_i32 = arith.constant 0 : i32
    %c0_i32_0 = arith.constant 0 : i32
    %c0_i32_1 = arith.constant 0 : i32
    return %c0_i32, %c0_i32_0 : i32, i32
  }
  func.func @transform_8(%arg0: i32) -> (i32, i32) {
    %c0_i32 = arith.constant 0 : i32
    %c0_i32_0 = arith.constant 0 : i32
    return %arg0, %c0_i32 : i32, i32
  }
}

</mosaic_0001>

<llo_original>
// kernel: dnet_forward.1
$region0: #{dnet_forward.1}
  #allocation0 [shape = 'u32[]', space=smem, size = 0x4, offset = 0x4, fixed_abs, tag = 'smem constant byte address 0x4 - core index']
  #allocation1 [shape = 'u32[144,128]{1,0:T(1,128)}', space=vmem, size = 0x12000, scoped, tag = 'internal scratch']
  #allocation2 [shape = 'f32[1,1]{1,0:T(1,128)S(1)}', space=vmem, size = 0x200, scoped, tag = 'scoped memory for dnet_forward.1']
  %s0 = inlined_call_operand.vmem [shape: f32[16,8], index: 0, kind: input, shape index: {}]
  %s1 = inlined_call_operand.vmem [shape: f32[1,128], index: 1, kind: input, shape index: {}]
  %s2 = inlined_call_operand.vmem [shape: bf16[32,128], index: 2, kind: input, shape index: {}]
  %s3 = inlined_call_operand.vmem [shape: f32[1,128], index: 3, kind: input, shape index: {}]
  %s4 = inlined_call_operand.vmem [shape: f32[32,10], index: 4, kind: input, shape index: {}]
  %s5 = inlined_call_operand.vmem [shape: f32[1,10], index: 5, kind: input, shape index: {}]
  %s6 = inlined_call_operand.vmem [shape: f32[10,1], index: 6, kind: input, shape index: {}]
  %s7 = inlined_call_operand.<no memory space> [shape: f32[1,1], index: 7, kind: input, shape index: {}]
  %s8 = inlined_call_operand.vmem [shape: f32[16,1], index: 8, kind: output, shape index: {}]
  %s9 = sld [smem:[#allocation0]]
  $region65: #{dnet_forward.1} parent=0
    _
  %s11 = ssub.s32 1, %s9
  %s12 = scalar_select 0, %s11, %s9
  %v13 = vstv %s7
  %14 = vst [vmem:[#allocation2] sm:$0x1] %v13
  loop: start=0, step=1, limit=4
  $region2: #{dnet_forward.1} parent=0 // loop_pre_header
    _
  $region3: #{dnet_forward.1} parent=0 // loop_header
    %s16 = sphi 0, %s20
    %p17 = scmp.ge.s32.totalorder %s16, 4
    %s26 = sphi 0, %s28
    %s29 = sphi 0, %s26
    %s30 = sphi 0, %s29
    %s46 = sphi 0, %s30
    %s50 = sphi 0, %s50
    %s52 = sphi 0, %s50
    %s53 = sphi 0, %s52
    %s67 = sphi 0, %s53
    %s71 = sphi 0, %s71
    %s73 = sphi 0, %s71
    %s74 = sphi 0, %s73
    %s88 = sphi 0, %s74
    %s92 = sphi 0, %s92
    %s94 = sphi 0, %s92
    %s95 = sphi 0, %s94
    %s109 = sphi 0, %s95
    %s113 = sphi 0, %s113
    %s115 = sphi 0, %s113
    %s116 = sphi 0, %s115
    %s130 = sphi 0, %s116
    %s134 = sphi 0, %s134
    %s136 = sphi 0, %s134
    %s137 = sphi 0, %s136
    %s151 = sphi 0, %s137
    %s155 = sphi 0, %s155
    %s157 = sphi 0, %s155
    %s158 = sphi 0, %s157
    %s172 = sphi 0, %s158
    %s176 = sphi 0, %s176
    %s178 = sphi 0, %s176
    %s179 = sphi 0, %s178
    %s193 = sphi 0, %s179
    %s199 = sphi 0, %s201
    %s202 = sphi 0, %s199
    %s203 = sphi 0, %s202
    %s219 = sphi 0, %s203
  $region4: #{dnet_forward.1} parent=0 // loop_header_branch
    %19 = sbr.rel (%p17) target = $region8
  $region5: #{dnet_forward.1} parent=0 // loop_body
    %s21 = ssub.s32 %s16, 1
    %s22 = ssub.s32 %s16, 2
    %s23 = sadd.s32 %s16, 1
    %s24 = ssub.s32 %s16, %s23
    %p25 = scmp.eq.s32.totalorder %s24, 0
    %s27 = sadd.s32 %s26, 1
    %s28 = scalar_select %p25, %s26, %s27
    %p31 = pneg %p25
    %p32 = scmp.eq.s32.totalorder %s16, 1
    %p33 = por %p31, %p32
    %p34 = scmp.ne.s32.totalorder %s26, %s29
    %p35 = scmp.eq.s32.totalorder %s16, 0
    %p36 = por %p34, %p35
    %p37 = scmp.ne.s32.totalorder %s26, %s29
    %p38 = scmp.eq.s32.totalorder %s21, 1
    %p39 = por %p37, %p38
    %p40 = scmp.ne.s32.totalorder %s29, %s30
    %p41 = scmp.eq.s32.totalorder %s21, 0
    %p42 = por %p40, %p41
    %p43 = scmp.ne.s32.totalorder %s29, %s30
    %p44 = scmp.eq.s32.totalorder %s22, 1
    %p45 = por %p43, %p44
    %p47 = scmp.ne.s32.totalorder %s30, %s46
    %p48 = scmp.eq.s32.totalorder %s22, 0
    %p49 = por %p47, %p48
    %s51 = sadd.s32 %s50, 1
    %p54 = scmp.eq.s32.totalorder %s16, 1
    %p55 = scmp.ne.s32.totalorder %s50, %s52
    %p56 = scmp.eq.s32.totalorder %s16, 0
    %p57 = por %p55, %p56
    %p58 = scmp.ne.s32.totalorder %s50, %s52
    %p59 = scmp.eq.s32.totalorder %s21, 1
    %p60 = por %p58, %p59
    %p61 = scmp.ne.s32.totalorder %s52, %s53
    %p62 = scmp.eq.s32.totalorder %s21, 0
    %p63 = por %p61, %p62
    %p64 = scmp.ne.s32.totalorder %s52, %s53
    %p65 = scmp.eq.s32.totalorder %s22, 1
    %p66 = por %p64, %p65
    %p68 = scmp.ne.s32.totalorder %s53, %s67
    %p69 = scmp.eq.s32.totalorder %s22, 0
    %p70 = por %p68, %p69
    %s72 = sadd.s32 %s71, 1
    %p75 = scmp.eq.s32.totalorder %s16, 1
    %p76 = scmp.ne.s32.totalorder %s71, %s73
    %p77 = scmp.eq.s32.totalorder %s16, 0
    %p78 = por %p76, %p77
    %p79 = scmp.ne.s32.totalorder %s71, %s73
    %p80 = scmp.eq.s32.totalorder %s21, 1
    %p81 = por %p79, %p80
    %p82 = scmp.ne.s32.totalorder %s73, %s74
    %p83 = scmp.eq.s32.totalorder %s21, 0
    %p84 = por %p82, %p83
    %p85 = scmp.ne.s32.totalorder %s73, %s74
    %p86 = scmp.eq.s32.totalorder %s22, 1
    %p87 = por %p85, %p86
    %p89 = scmp.ne.s32.totalorder %s74, %s88
    %p90 = scmp.eq.s32.totalorder %s22, 0
    %p91 = por %p89, %p90
    %s93 = sadd.s32 %s92, 1
    %p96 = scmp.eq.s32.totalorder %s16, 1
    %p97 = scmp.ne.s32.totalorder %s92, %s94
    %p98 = scmp.eq.s32.totalorder %s16, 0
    %p99 = por %p97, %p98
    %p100 = scmp.ne.s32.totalorder %s92, %s94
    %p101 = scmp.eq.s32.totalorder %s21, 1
    %p102 = por %p100, %p101
    %p103 = scmp.ne.s32.totalorder %s94, %s95
    %p104 = scmp.eq.s32.totalorder %s21, 0
    %p105 = por %p103, %p104
    %p106 = scmp.ne.s32.totalorder %s94, %s95
    %p107 = scmp.eq.s32.totalorder %s22, 1
    %p108 = por %p106, %p107
    %p110 = scmp.ne.s32.totalorder %s95, %s109
    %p111 = scmp.eq.s32.totalorder %s22, 0
    %p112 = por %p110, %p111
    %s114 = sadd.s32 %s113, 1
    %p117 = scmp.eq.s32.totalorder %s16, 1
    %p118 = scmp.ne.s32.totalorder %s113, %s115
    %p119 = scmp.eq.s32.totalorder %s16, 0
    %p120 = por %p118, %p119
    %p121 = scmp.ne.s32.totalorder %s113, %s115
    %p122 = scmp.eq.s32.totalorder %s21, 1
    %p123 = por %p121, %p122
    %p124 = scmp.ne.s32.totalorder %s115, %s116
    %p125 = scmp.eq.s32.totalorder %s21, 0
    %p126 = por %p124, %p125
    %p127 = scmp.ne.s32.totalorder %s115, %s116
    %p128 = scmp.eq.s32.totalorder %s22, 1
    %p129 = por %p127, %p128
    %p131 = scmp.ne.s32.totalorder %s116, %s130
    %p132 = scmp.eq.s32.totalorder %s22, 0
    %p133 = por %p131, %p132
    %s135 = sadd.s32 %s134, 1
    %p138 = scmp.eq.s32.totalorder %s16, 1
    %p139 = scmp.ne.s32.totalorder %s134, %s136
    %p140 = scmp.eq.s32.totalorder %s16, 0
    %p141 = por %p139, %p140
    %p142 = scmp.ne.s32.totalorder %s134, %s136
    %p143 = scmp.eq.s32.totalorder %s21, 1
    %p144 = por %p142, %p143
    %p145 = scmp.ne.s32.totalorder %s136, %s137
    %p146 = scmp.eq.s32.totalorder %s21, 0
    %p147 = por %p145, %p146
    %p148 = scmp.ne.s32.totalorder %s136, %s137
    %p149 = scmp.eq.s32.totalorder %s22, 1
    %p150 = por %p148, %p149
    %p152 = scmp.ne.s32.totalorder %s137, %s151
    %p153 = scmp.eq.s32.totalorder %s22, 0
    %p154 = por %p152, %p153
    %s156 = sadd.s32 %s155, 1
    %p159 = scmp.eq.s32.totalorder %s16, 1
    %p160 = scmp.ne.s32.totalorder %s155, %s157
    %p161 = scmp.eq.s32.totalorder %s16, 0
    %p162 = por %p160, %p161
    %p163 = scmp.ne.s32.totalorder %s155, %s157
    %p164 = scmp.eq.s32.totalorder %s21, 1
    %p165 = por %p163, %p164
    %p166 = scmp.ne.s32.totalorder %s157, %s158
    %p167 = scmp.eq.s32.totalorder %s21, 0
    %p168 = por %p166, %p167
    %p169 = scmp.ne.s32.totalorder %s157, %s158
    %p170 = scmp.eq.s32.totalorder %s22, 1
    %p171 = por %p169, %p170
    %p173 = scmp.ne.s32.totalorder %s158, %s172
    %p174 = scmp.eq.s32.totalorder %s22, 0
    %p175 = por %p173, %p174
    %s177 = sadd.s32 %s176, 1
    %p180 = scmp.eq.s32.totalorder %s16, 1
    %p181 = scmp.ne.s32.totalorder %s176, %s178
    %p182 = scmp.eq.s32.totalorder %s16, 0
    %p183 = por %p181, %p182
    %p184 = scmp.ne.s32.totalorder %s176, %s178
    %p185 = scmp.eq.s32.totalorder %s21, 1
    %p186 = por %p184, %p185
    %p187 = scmp.ne.s32.totalorder %s178, %s179
    %p188 = scmp.eq.s32.totalorder %s21, 0
    %p189 = por %p187, %p188
    %p190 = scmp.ne.s32.totalorder %s178, %s179
    %p191 = scmp.eq.s32.totalorder %s22, 1
    %p192 = por %p190, %p191
    %p194 = scmp.ne.s32.totalorder %s179, %s193
    %p195 = scmp.eq.s32.totalorder %s22, 0
    %p196 = por %p194, %p195
    %s197 = ssub.s32 %s16, %s23
    %p198 = scmp.eq.s32.totalorder %s197, 0
    %s200 = sadd.s32 %s199, 1
    %s201 = scalar_select %p198, %s199, %s200
    %p204 = pneg %p198
    %p205 = scmp.eq.s32.totalorder %s16, 1
    %p206 = por %p204, %p205
    %p207 = scmp.ne.s32.totalorder %s199, %s202
    %p208 = scmp.eq.s32.totalorder %s16, 0
    %p209 = por %p207, %p208
    %p210 = scmp.ne.s32.totalorder %s199, %s202
    %p211 = scmp.eq.s32.totalorder %s21, 1
    %p212 = por %p210, %p211
    %p213 = scmp.ne.s32.totalorder %s202, %s203
    %p214 = scmp.eq.s32.totalorder %s21, 0
    %p215 = por %p213, %p214
    %p216 = scmp.ne.s32.totalorder %s202, %s203
    %p217 = scmp.eq.s32.totalorder %s22, 1
    %p218 = por %p216, %p217
    %p220 = scmp.ne.s32.totalorder %s203, %s219
    %p221 = scmp.eq.s32.totalorder %s22, 0
    %p222 = por %p220, %p221
    %p223 = scmp.le.s32.totalorder 1, %s16
    %p224 = scmp.lt.s32.totalorder %s16, 3
    %p225 = pnand %p223, %p224
    %p226 = pneg %p225
    // Predicated region
    $region9: #{dnet_forward.1} parent=5 // pred_check
      _
    $region10: #{dnet_forward.1} parent=5 // pred_check_branch
      %228 = sbr.rel (%p225) target = $region12
    $region11: #{dnet_forward.1} parent=5 // pred_region
      %s229 = ssub.s32 %s16, 1
      // Predicated region
      $region13: #{dnet_forward.1} parent=11 // pred_check
        %p230 = pneg %p63
      $region14: #{dnet_forward.1} parent=11 // pred_check_branch
        %232 = sbr.rel (%p230) target = $region16
      $region15: #{dnet_forward.1} parent=11 // pred_region
        _
      $region16: #{dnet_forward.1} parent=11 // pred_fallthru
        _
      // Predicated region
      $region17: #{dnet_forward.1} parent=11 // pred_check
        %p233 = pneg %p84
      $region18: #{dnet_forward.1} parent=11 // pred_check_branch
        %235 = sbr.rel (%p233) target = $region20
      $region19: #{dnet_forward.1} parent=11 // pred_region
        _
      $region20: #{dnet_forward.1} parent=11 // pred_fallthru
        _
      // Predicated region
      $region21: #{dnet_forward.1} parent=11 // pred_check
        %p236 = pneg %p105
      $region22: #{dnet_forward.1} parent=11 // pred_check_branch
        %238 = sbr.rel (%p236) target = $region24
      $region23: #{dnet_forward.1} parent=11 // pred_region
        _
      $region24: #{dnet_forward.1} parent=11 // pred_fallthru
        _
      // Predicated region
      $region25: #{dnet_forward.1} parent=11 // pred_check
        %p239 = pneg %p126
      $region26: #{dnet_forward.1} parent=11 // pred_check_branch
        %241 = sbr.rel (%p239) target = $region28
      $region27: #{dnet_forward.1} parent=11 // pred_region
        _
      $region28: #{dnet_forward.1} parent=11 // pred_fallthru
        _
      // Predicated region
      $region29: #{dnet_forward.1} parent=11 // pred_check
        %p242 = pneg %p147
      $region30: #{dnet_forward.1} parent=11 // pred_check_branch
        %244 = sbr.rel (%p242) target = $region32
      $region31: #{dnet_forward.1} parent=11 // pred_region
        _
      $region32: #{dnet_forward.1} parent=11 // pred_fallthru
        _
      // Predicated region
      $region33: #{dnet_forward.1} parent=11 // pred_check
        %p245 = pneg %p168
      $region34: #{dnet_forward.1} parent=11 // pred_check_branch
        %247 = sbr.rel (%p245) target = $region36
      $region35: #{dnet_forward.1} parent=11 // pred_region
        _
      $region36: #{dnet_forward.1} parent=11 // pred_fallthru
        _
      // Predicated region
      $region37: #{dnet_forward.1} parent=11 // pred_check
        %p248 = pneg %p189
      $region38: #{dnet_forward.1} parent=11 // pred_check_branch
        %250 = sbr.rel (%p248) target = $region40
      $region39: #{dnet_forward.1} parent=11 // pred_region
        _
      $region40: #{dnet_forward.1} parent=11 // pred_fallthru
        _
    $region12: #{dnet_forward.1} parent=5 // pred_fallthru
      _
    %p251 = scmp.lt.s32.totalorder %s16, 2
    // Predicated region
    $region41: #{dnet_forward.1} parent=5 // pred_check
      %p252 = pneg %p251
    $region42: #{dnet_forward.1} parent=5 // pred_check_branch
      %254 = sbr.rel (%p252) target = $region44
    $region43: #{dnet_forward.1} parent=5 // pred_region
      // Predicated region
      $region45: #{dnet_forward.1} parent=43 // pred_check
        %p255 = pneg %p36
      $region46: #{dnet_forward.1} parent=43 // pred_check_branch
        %257 = sbr.rel (%p255) target = $region48
      $region47: #{dnet_forward.1} parent=43 // pred_region
        %p258 = scmp.lt.s32.totalorder %s16, 1
        %s259 = scalar_select %p258, %s16, 1
        %s260 = smul.addr %s259, 8
        %s261 = scalar_lea.vmem %s0, %s260
      $region48: #{dnet_forward.1} parent=43 // pred_fallthru
        _
    $region44: #{dnet_forward.1} parent=5 // pred_fallthru
      _
    %p262 = scmp.le.s32.totalorder 1, %s16
    %p263 = scmp.lt.s32.totalorder %s16, 3
    %p264 = pnand %p262, %p263
    %p265 = pneg %p264
    // Predicated region
    $region49: #{dnet_forward.1} parent=5 // pred_check
      _
    $region50: #{dnet_forward.1} parent=5 // pred_check_branch
      %267 = sbr.rel (%p264) target = $region52
    $region51: #{dnet_forward.1} parent=5 // pred_region
      %s268 = ssub.s32 %s16, 1
      %p269 = scmp.lt.s32.totalorder %s21, 1
      %s270 = scalar_select %p269, %s21, 1
      %s271 = smul.addr %s270, 8
      %s272 = scalar_lea.vmem %s0, %s271
      %p273 = pneg %p42
      %p274 = pneg %p39
      %p275 = pneg %p63
      %p276 = pneg %p60
      %p277 = pneg %p84
      %p278 = pneg %p81
      %p279 = pneg %p105
      %p280 = pneg %p102
      %p281 = pneg %p126
      %p282 = pneg %p123
      %p283 = pneg %p147
      %p284 = pneg %p144
      %p285 = pneg %p168
      %p286 = pneg %p165
      %p287 = pneg %p189
      %p288 = pneg %p186
      %p289 = pneg %p215
      %p290 = pneg %p212
      %p291 = scmp.lt.s32.totalorder %s21, 1
      %s292 = scalar_select %p291, %s21, 1
      %s293 = smul.addr %s292, 8
      %s294 = scalar_lea.vmem %s8, %s293
      %p295 = scmp.lt.s32.totalorder %s21, 1
      %s296 = scalar_select %p295, %s21, 1
      %s297 = smul.addr %s296, 8
      %s298 = scalar_lea.vmem %s0, %s297
      %p299 = scmp.lt.s32.totalorder %s21, 1
      %s300 = scalar_select %p299, %s21, 1
      %s301 = smul.addr %s300, 8
      %s302 = scalar_lea.vmem %s8, %s301
      %v304 = vld [vmem:[%s298] sm:$0xff]
      %v305 = vld [vmem:[%s1] sm:$0x1]
      %v306 = vld [vmem:[%s2] sm:$0xf]
      %v307 = vld [vmem:[%s2 + $0x4] sm:$0xf]
      %v308 = vld [vmem:[%s2 + $0x8] sm:$0xf]
      %v309 = vld [vmem:[%s2 + $0xc] sm:$0xf]
      %v310 = vld [vmem:[%s3] sm:$0x1]
      %312 = vset.pattern.permute.xlu0 0
      %313 = vperm.xlu0 %312, %v304
      %v314 = vpop.permute.xlu0 %313
      %v317 = vlaneseq
      %v318 = vshrl.u32 %v317, 7
      %v319 = vsub.s32 0, %v318
      %v320 = vrot.slane %v305, %v319
      %v322 = vmul.f32 %v314, %v320
      %v327 = vunpack.c.l.b16 %v306
      %v328 = vunpack.c.l.b16 %v307
      %v329 = vunpack.c.l.b16 %v308
      %v330 = vunpack.c.l.b16 %v309
      %v331 = vpack.c.b16 %v328, %v327
      %v332 = vpack.c.b16 %v330, %v329
      %vm335 = vcmask 261120
      %v337 = vsel %vm335, 0, 0
      %339 = vmatprep.subr.bf16.mxu0 0
      %340 = vmatpush1.bf16.msra.mxu0 %v331
      %341 = vmatprep.subr.bf16.mxu0 0
      %342 = vmatpush1.bf16.msra.mxu0 %v332
      %343 = vmatprep.subr.bf16.mxu0 0
      %344 = vmatpush1.bf16.msra.mxu0 0
      %345 = vmatprep.subr.bf16.mxu0 0
      %346 = vmatpush1.bf16.msra.mxu0 0
      %347 = vmatprep.subr.bf16.mxu0 0
      %348 = vmatpush1.bf16.msra.mxu0 0
      %349 = vmatprep.subr.bf16.mxu0 0
      %350 = vmatpush1.bf16.msra.mxu0 0
      %351 = vmatprep.subr.bf16.mxu0 0
      %352 = vmatpush1.bf16.msra.mxu0 0
      %353 = vmatprep.subr.bf16.mxu0 0
      %354 = vmatpush1.bf16.msra.mxu0 0
      %355 = vmatprep.subr.bf16.mxu0 0
      %356 = vmatpush1.bf16.msra.mxu0 0
      %357 = vmatprep.subr.bf16.mxu0 0
      %358 = vmatpush1.bf16.msra.mxu0 0
      %359 = vmatprep.subr.bf16.mxu0 0
      %360 = vmatpush1.bf16.msra.mxu0 0
      %361 = vmatprep.subr.bf16.mxu0 0
      %362 = vmatpush1.bf16.msra.mxu0 0
      %363 = vmatprep.subr.bf16.mxu0 0
      %364 = vmatpush1.bf16.msra.mxu0 0
      %365 = vmatprep.subr.bf16.mxu0 0
      %366 = vmatpush1.bf16.msra.mxu0 0
      %367 = vmatprep.subr.bf16.mxu0 0
      %368 = vmatpush1.bf16.msra.mxu0 0
      %369 = vmatprep.subr.bf16.mxu0 0
      %370 = vmatpush1.bf16.msra.mxu0 0
      %371 = vmatprep.mubr.bf16.mxu0 0
      %372 = vmatmul.mubr.bf16.gmra.mrb[0].mxu0 %v337
      %v373 = vpop.f32.mrb[0].mxu0
      %v374 = vadd.f32 0.0, %v373
      %v375 = vpop.f32.mrb[0].mxu0
      %v376 = vpop.f32.mrb[0].mxu0
      %v377 = vpop.f32.mrb[0].mxu0
      %378 = vdwg.mxu0
      %v379 = vadd.f32 %v322, %v374
      %v381 = vlaneseq
      %v382 = vshrl.u32 %v381, 7
      %v383 = vsub.s32 0, %v382
      %v384 = vrot.slane %v310, %v383
      %v386 = vadd.f32 %v379, %v384
      %v387 = vtanh.pop %v386
      %v388 = vadd.f32 %v387, 1.0
      %v389 = vmul.f32 %v388, 0.0
      %391 = vrot.lane.b32.xlu0 %v387, 64
      %v392 = vpop.permute.xlu0 %391
      %v394 = vmul.f32 %v388, %v392
      %396 = vrot.lane.b32.xlu0 %v394, 32
      %v397 = vpop.permute.xlu0 %396
      %v399 = vadd.f32 %v389, %v397
      %v400 = vmul.f32 %v399, 0.5
      %v401 = vmul.f32 %v388, 0.5
      %v402 = vtanh.pop %v400
      %404 = vrot.lane.b32.xlu0 %v402, 64
      %v405 = vpop.permute.xlu0 %404
      %v407 = vmul.f32 %v401, %v405
      %408 = vset.pattern.permute.xlu0 1
      %409 = vperm.xlu0 %408, %v304
      %v410 = vpop.permute.xlu0 %409
      %v412 = vmul.f32 %v410, %v320
      %v413 = vpack.c.bf16 %v407, %v407
      %415 = vrot.lane.b32.xlu0 %v413, 32
      %v416 = vpop.permute.xlu0 %415
      %v418 = vsel %vm335, %v416, 0
      %420 = vmatprep.subr.bf16.mxu0 0
      %421 = vmatpush1.bf16.msra.mxu0 %v331
      %422 = vmatprep.subr.bf16.mxu0 0
      %423 = vmatpush1.bf16.msra.mxu0 %v332
      %424 = vmatprep.subr.bf16.mxu0 0
      %425 = vmatpush1.bf16.msra.mxu0 0
      %426 = vmatprep.subr.bf16.mxu0 0
      %427 = vmatpush1.bf16.msra.mxu0 0
      %428 = vmatprep.subr.bf16.mxu0 0
      %429 = vmatpush1.bf16.msra.mxu0 0
      %430 = vmatprep.subr.bf16.mxu0 0
      %431 = vmatpush1.bf16.msra.mxu0 0
      %432 = vmatprep.subr.bf16.mxu0 0
      %433 = vmatpush1.bf16.msra.mxu0 0
      %434 = vmatprep.subr.bf16.mxu0 0
      %435 = vmatpush1.bf16.msra.mxu0 0
      %436 = vmatprep.subr.bf16.mxu0 0
      %437 = vmatpush1.bf16.msra.mxu0 0
      %438 = vmatprep.subr.bf16.mxu0 0
      %439 = vmatpush1.bf16.msra.mxu0 0
      %440 = vmatprep.subr.bf16.mxu0 0
      %441 = vmatpush1.bf16.msra.mxu0 0
      %442 = vmatprep.subr.bf16.mxu0 0
      %443 = vmatpush1.bf16.msra.mxu0 0
      %444 = vmatprep.subr.bf16.mxu0 0
      %445 = vmatpush1.bf16.msra.mxu0 0
      %446 = vmatprep.subr.bf16.mxu0 0
      %447 = vmatpush1.bf16.msra.mxu0 0
      %448 = vmatprep.subr.bf16.mxu0 0
      %449 = vmatpush1.bf16.msra.mxu0 0
      %450 = vmatprep.subr.bf16.mxu0 0
      %451 = vmatpush1.bf16.msra.mxu0 0
      %452 = vmatprep.mubr.bf16.mxu0 0
      %453 = vmatmul.mubr.bf16.gmra.mrb[0].mxu0 %v418
      %v454 = vpop.f32.mrb[0].mxu0
      %v455 = vadd.f32 0.0, %v454
      %v456 = vpop.f32.mrb[0].mxu0
      %v457 = vpop.f32.mrb[0].mxu0
      %v458 = vpop.f32.mrb[0].mxu0
      %459 = vdwg.mxu0
      %v460 = vadd.f32 %v412, %v455
      %v461 = vadd.f32 %v460, %v384
      %v462 = vtanh.pop %v461
      %v463 = vadd.f32 %v462, 1.0
      %v464 = vmul.f32 %v463, %v400
      %466 = vrot.lane.b32.xlu0 %v462, 64
      %v467 = vpop.permute.xlu0 %466
      %v469 = vmul.f32 %v463, %v467
      %471 = vrot.lane.b32.xlu0 %v469, 32
      %v472 = vpop.permute.xlu0 %471
      %v474 = vadd.f32 %v464, %v472
      %v475 = vmul.f32 %v474, 0.5
      %v476 = vmul.f32 %v463, 0.5
      %v477 = vtanh.pop %v475
      %479 = vrot.lane.b32.xlu0 %v477, 64
      %v480 = vpop.permute.xlu0 %479
      %v482 = vmul.f32 %v476, %v480
      %483 = vset.pattern.permute.xlu0 2
      %484 = vperm.xlu0 %483, %v304
      %v485 = vpop.permute.xlu0 %484
      %v487 = vmul.f32 %v485, %v320
      %v488 = vpack.c.bf16 %v482, %v482
      %490 = vrot.lane.b32.xlu0 %v488, 32
      %v491 = vpop.permute.xlu0 %490
      %v493 = vsel %vm335, %v491, 0
      %495 = vmatprep.subr.bf16.mxu0 0
      %496 = vmatpush1.bf16.msra.mxu0 %v331
      %497 = vmatprep.subr.bf16.mxu0 0
      %498 = vmatpush1.bf16.msra.mxu0 %v332
      %499 = vmatprep.subr.bf16.mxu0 0
      %500 = vmatpush1.bf16.msra.mxu0 0
      %501 = vmatprep.subr.bf16.mxu0 0
      %502 = vmatpush1.bf16.msra.mxu0 0
      %503 = vmatprep.subr.bf16.mxu0 0
      %504 = vmatpush1.bf16.msra.mxu0 0
      %505 = vmatprep.subr.bf16.mxu0 0
      %506 = vmatpush1.bf16.msra.mxu0 0
      %507 = vmatprep.subr.bf16.mxu0 0
      %508 = vmatpush1.bf16.msra.mxu0 0
      %509 = vmatprep.subr.bf16.mxu0 0
      %510 = vmatpush1.bf16.msra.mxu0 0
      %511 = vmatprep.subr.bf16.mxu0 0
      %512 = vmatpush1.bf16.msra.mxu0 0
      %513 = vmatprep.subr.bf16.mxu0 0
      %514 = vmatpush1.bf16.msra.mxu0 0
      %515 = vmatprep.subr.bf16.mxu0 0
      %516 = vmatpush1.bf16.msra.mxu0 0
      %517 = vmatprep.subr.bf16.mxu0 0
      %518 = vmatpush1.bf16.msra.mxu0 0
      %519 = vmatprep.subr.bf16.mxu0 0
      %520 = vmatpush1.bf16.msra.mxu0 0
      %521 = vmatprep.subr.bf16.mxu0 0
      %522 = vmatpush1.bf16.msra.mxu0 0
      %523 = vmatprep.subr.bf16.mxu0 0
      %524 = vmatpush1.bf16.msra.mxu0 0
      %525 = vmatprep.subr.bf16.mxu0 0
      %526 = vmatpush1.bf16.msra.mxu0 0
      %527 = vmatprep.mubr.bf16.mxu0 0
      %528 = vmatmul.mubr.bf16.gmra.mrb[0].mxu0 %v493
      %v529 = vpop.f32.mrb[0].mxu0
      %v530 = vadd.f32 0.0, %v529
      %v531 = vpop.f32.mrb[0].mxu0
      %v532 = vpop.f32.mrb[0].mxu0
      %v533 = vpop.f32.mrb[0].mxu0
      %534 = vdwg.mxu0
      %v535 = vadd.f32 %v487, %v530
      %v536 = vadd.f32 %v535, %v384
      %v537 = vtanh.pop %v536
      %v538 = vadd.f32 %v537, 1.0
      %v539 = vmul.f32 %v538, %v475
      %541 = vrot.lane.b32.xlu0 %v537, 64
      %v542 = vpop.permute.xlu0 %541
      %v544 = vmul.f32 %v538, %v542
      %546 = vrot.lane.b32.xlu0 %v544, 32
      %v547 = vpop.permute.xlu0 %546
      %v549 = vadd.f32 %v539, %v547
      %v550 = vmul.f32 %v549, 0.5
      %v551 = vmul.f32 %v538, 0.5
      %v552 = vtanh.pop %v550
      %554 = vrot.lane.b32.xlu0 %v552, 64
      %v555 = vpop.permute.xlu0 %554
      %v557 = vmul.f32 %v551, %v555
      %558 = vset.pattern.permute.xlu0 3
      %559 = vperm.xlu0 %558, %v304
      %v560 = vpop.permute.xlu0 %559
      %v562 = vmul.f32 %v560, %v320
      %v563 = vpack.c.bf16 %v557, %v557
      %565 = vrot.lane.b32.xlu0 %v563, 32
      %v566 = vpop.permute.xlu0 %565
      %v568 = vsel %vm335, %v566, 0
      %570 = vmatprep.subr.bf16.mxu0 0
      %571 = vmatpush1.bf16.msra.mxu0 %v331
      %572 = vmatprep.subr.bf16.mxu0 0
      %573 = vmatpush1.bf16.msra.mxu0 %v332
      %574 = vmatprep.subr.bf16.mxu0 0
      %575 = vmatpush1.bf16.msra.mxu0 0
      %576 = vmatprep.subr.bf16.mxu0 0
      %577 = vmatpush1.bf16.msra.mxu0 0
      %578 = vmatprep.subr.bf16.mxu0 0
      %579 = vmatpush1.bf16.msra.mxu0 0
      %580 = vmatprep.subr.bf16.mxu0 0
      %581 = vmatpush1.bf16.msra.mxu0 0
      %582 = vmatprep.subr.bf16.mxu0 0
      %583 = vmatpush1.bf16.msra.mxu0 0
      %584 = vmatprep.subr.bf16.mxu0 0
      %585 = vmatpush1.bf16.msra.mxu0 0
      %586 = vmatprep.subr.bf16.mxu0 0
      %587 = vmatpush1.bf16.msra.mxu0 0
      %588 = vmatprep.subr.bf16.mxu0 0
      %589 = vmatpush1.bf16.msra.mxu0 0
      %590 = vmatprep.subr.bf16.mxu0 0
      %591 = vmatpush1.bf16.msra.mxu0 0
      %592 = vmatprep.subr.bf16.mxu0 0
      %593 = vmatpush1.bf16.msra.mxu0 0
      %594 = vmatprep.subr.bf16.mxu0 0
      %595 = vmatpush1.bf16.msra.mxu0 0
      %596 = vmatprep.subr.bf16.mxu0 0
      %597 = vmatpush1.bf16.msra.mxu0 0
      %598 = vmatprep.subr.bf16.mxu0 0
      %599 = vmatpush1.bf16.msra.mxu0 0
      %600 = vmatprep.subr.bf16.mxu0 0
      %601 = vmatpush1.bf16.msra.mxu0 0
      %602 = vmatprep.mubr.bf16.mxu0 0
      %603 = vmatmul.mubr.bf16.gmra.mrb[0].mxu0 %v568
      %v604 = vpop.f32.mrb[0].mxu0
      %v605 = vadd.f32 0.0, %v604
      %v606 = vpop.f32.mrb[0].mxu0
      %v607 = vpop.f32.mrb[0].mxu0
      %v608 = vpop.f32.mrb[0].mxu0
      %609 = vdwg.mxu0
      %v610 = vadd.f32 %v562, %v605
      %v611 = vadd.f32 %v610, %v384
      %v612 = vtanh.pop %v611
      %v613 = vadd.f32 %v612, 1.0
      %v614 = vmul.f32 %v613, %v550
      %616 = vrot.lane.b32.xlu0 %v612, 64
      %v617 = vpop.permute.xlu0 %616
      %v619 = vmul.f32 %v613, %v617
      %621 = vrot.lane.b32.xlu0 %v619, 32
      %v622 = vpop.permute.xlu0 %621
      %v624 = vadd.f32 %v614, %v622
      %v625 = vmul.f32 %v624, 0.5
      %v626 = vmul.f32 %v613, 0.5
      %v627 = vtanh.pop %v625
      %629 = vrot.lane.b32.xlu0 %v627, 64
      %v630 = vpop.permute.xlu0 %629
      %v632 = vmul.f32 %v626, %v630
      %633 = vset.pattern.permute.xlu0 4
      %634 = vperm.xlu0 %633, %v304
      %v635 = vpop.permute.xlu0 %634
      %v637 = vmul.f32 %v635, %v320
      %v638 = vpack.c.bf16 %v632, %v632
      %640 = vrot.lane.b32.xlu0 %v638, 32
      %v641 = vpop.permute.xlu0 %640
      %v643 = vsel %vm335, %v641, 0
      %645 = vmatprep.subr.bf16.mxu0 0
      %646 = vmatpush1.bf16.msra.mxu0 %v331
      %647 = vmatprep.subr.bf16.mxu0 0
      %648 = vmatpush1.bf16.msra.mxu0 %v332
      %649 = vmatprep.subr.bf16.mxu0 0
      %650 = vmatpush1.bf16.msra.mxu0 0
      %651 = vmatprep.subr.bf16.mxu0 0
      %652 = vmatpush1.bf16.msra.mxu0 0
      %653 = vmatprep.subr.bf16.mxu0 0
      %654 = vmatpush1.bf16.msra.mxu0 0
      %655 = vmatprep.subr.bf16.mxu0 0
      %656 = vmatpush1.bf16.msra.mxu0 0
      %657 = vmatprep.subr.bf16.mxu0 0
      %658 = vmatpush1.bf16.msra.mxu0 0
      %659 = vmatprep.subr.bf16.mxu0 0
      %660 = vmatpush1.bf16.msra.mxu0 0
      %661 = vmatprep.subr.bf16.mxu0 0
      %662 = vmatpush1.bf16.msra.mxu0 0
      %663 = vmatprep.subr.bf16.mxu0 0
      %664 = vmatpush1.bf16.msra.mxu0 0
      %665 = vmatprep.subr.bf16.mxu0 0
      %666 = vmatpush1.bf16.msra.mxu0 0
      %667 = vmatprep.subr.bf16.mxu0 0
      %668 = vmatpush1.bf16.msra.mxu0 0
      %669 = vmatprep.subr.bf16.mxu0 0
      %670 = vmatpush1.bf16.msra.mxu0 0
      %671 = vmatprep.subr.bf16.mxu0 0
      %672 = vmatpush1.bf16.msra.mxu0 0
      %673 = vmatprep.subr.bf16.mxu0 0
      %674 = vmatpush1.bf16.msra.mxu0 0
      %675 = vmatprep.subr.bf16.mxu0 0
      %676 = vmatpush1.bf16.msra.mxu0 0
      %677 = vmatprep.mubr.bf16.mxu0 0
      %678 = vmatmul.mubr.bf16.gmra.mrb[0].mxu0 %v643
      %v679 = vpop.f32.mrb[0].mxu0
      %v680 = vadd.f32 0.0, %v679
      %v681 = vpop.f32.mrb[0].mxu0
      %v682 = vpop.f32.mrb[0].mxu0
      %v683 = vpop.f32.mrb[0].mxu0
      %684 = vdwg.mxu0
      %v685 = vadd.f32 %v637, %v680
      %v686 = vadd.f32 %v685, %v384
      %v687 = vtanh.pop %v686
      %v688 = vadd.f32 %v687, 1.0
      %v689 = vmul.f32 %v688, %v625
      %691 = vrot.lane.b32.xlu0 %v687, 64
      %v692 = vpop.permute.xlu0 %691
      %v694 = vmul.f32 %v688, %v692
      %696 = vrot.lane.b32.xlu0 %v694, 32
      %v697 = vpop.permute.xlu0 %696
      %v699 = vadd.f32 %v689, %v697
      %v700 = vmul.f32 %v699, 0.5
      %v701 = vmul.f32 %v688, 0.5
      %v702 = vtanh.pop %v700
      %704 = vrot.lane.b32.xlu0 %v702, 64
      %v705 = vpop.permute.xlu0 %704
      %v707 = vmul.f32 %v701, %v705
      %708 = vset.pattern.permute.xlu0 5
      %709 = vperm.xlu0 %708, %v304
      %v710 = vpop.permute.xlu0 %709
      %v712 = vmul.f32 %v710, %v320
      %v713 = vpack.c.bf16 %v707, %v707
      %715 = vrot.lane.b32.xlu0 %v713, 32
      %v716 = vpop.permute.xlu0 %715
      %v718 = vsel %vm335, %v716, 0
      %720 = vmatprep.subr.bf16.mxu0 0
      %721 = vmatpush1.bf16.msra.mxu0 %v331
      %722 = vmatprep.subr.bf16.mxu0 0
      %723 = vmatpush1.bf16.msra.mxu0 %v332
      %724 = vmatprep.subr.bf16.mxu0 0
      %725 = vmatpush1.bf16.msra.mxu0 0
      %726 = vmatprep.subr.bf16.mxu0 0
      %727 = vmatpush1.bf16.msra.mxu0 0
      %728 = vmatprep.subr.bf16.mxu0 0
      %729 = vmatpush1.bf16.msra.mxu0 0
      %730 = vmatprep.subr.bf16.mxu0 0
      %731 = vmatpush1.bf16.msra.mxu0 0
      %732 = vmatprep.subr.bf16.mxu0 0
      %733 = vmatpush1.bf16.msra.mxu0 0
      %734 = vmatprep.subr.bf16.mxu0 0
      %735 = vmatpush1.bf16.msra.mxu0 0
      %736 = vmatprep.subr.bf16.mxu0 0
      %737 = vmatpush1.bf16.msra.mxu0 0
      %738 = vmatprep.subr.bf16.mxu0 0
      %739 = vmatpush1.bf16.msra.mxu0 0
      %740 = vmatprep.subr.bf16.mxu0 0
      %741 = vmatpush1.bf16.msra.mxu0 0
      %742 = vmatprep.subr.bf16.mxu0 0
      %743 = vmatpush1.bf16.msra.mxu0 0
      %744 = vmatprep.subr.bf16.mxu0 0
      %745 = vmatpush1.bf16.msra.mxu0 0
      %746 = vmatprep.subr.bf16.mxu0 0
      %747 = vmatpush1.bf16.msra.mxu0 0
      %748 = vmatprep.subr.bf16.mxu0 0
      %749 = vmatpush1.bf16.msra.mxu0 0
      %750 = vmatprep.subr.bf16.mxu0 0
      %751 = vmatpush1.bf16.msra.mxu0 0
      %752 = vmatprep.mubr.bf16.mxu0 0
      %753 = vmatmul.mubr.bf16.gmra.mrb[0].mxu0 %v718
      %v754 = vpop.f32.mrb[0].mxu0
      %v755 = vadd.f32 0.0, %v754
      %v756 = vpop.f32.mrb[0].mxu0
      %v757 = vpop.f32.mrb[0].mxu0
      %v758 = vpop.f32.mrb[0].mxu0
      %759 = vdwg.mxu0
      %v760 = vadd.f32 %v712, %v755
      %v761 = vadd.f32 %v760, %v384
      %v762 = vtanh.pop %v761
      %v763 = vadd.f32 %v762, 1.0
      %v764 = vmul.f32 %v763, %v700
      %766 = vrot.lane.b32.xlu0 %v762, 64
      %v767 = vpop.permute.xlu0 %766
      %v769 = vmul.f32 %v763, %v767
      %771 = vrot.lane.b32.xlu0 %v769, 32
      %v772 = vpop.permute.xlu0 %771
      %v774 = vadd.f32 %v764, %v772
      %v775 = vmul.f32 %v774, 0.5
      %v776 = vmul.f32 %v763, 0.5
      %v777 = vtanh.pop %v775
      %779 = vrot.lane.b32.xlu0 %v777, 64
      %v780 = vpop.permute.xlu0 %779
      %v782 = vmul.f32 %v776, %v780
      %783 = vset.pattern.permute.xlu0 6
      %784 = vperm.xlu0 %783, %v304
      %v785 = vpop.permute.xlu0 %784
      %v787 = vmul.f32 %v785, %v320
      %v788 = vpack.c.bf16 %v782, %v782
      %790 = vrot.lane.b32.xlu0 %v788, 32
      %v791 = vpop.permute.xlu0 %790
      %v793 = vsel %vm335, %v791, 0
      %795 = vmatprep.subr.bf16.mxu0 0
      %796 = vmatpush1.bf16.msra.mxu0 %v331
      %797 = vmatprep.subr.bf16.mxu0 0
      %798 = vmatpush1.bf16.msra.mxu0 %v332
      %799 = vmatprep.subr.bf16.mxu0 0
      %800 = vmatpush1.bf16.msra.mxu0 0
      %801 = vmatprep.subr.bf16.mxu0 0
      %802 = vmatpush1.bf16.msra.mxu0 0
      %803 = vmatprep.subr.bf16.mxu0 0
      %804 = vmatpush1.bf16.msra.mxu0 0
      %805 = vmatprep.subr.bf16.mxu0 0
      %806 = vmatpush1.bf16.msra.mxu0 0
      %807 = vmatprep.subr.bf16.mxu0 0
      %808 = vmatpush1.bf16.msra.mxu0 0
      %809 = vmatprep.subr.bf16.mxu0 0
      %810 = vmatpush1.bf16.msra.mxu0 0
      %811 = vmatprep.subr.bf16.mxu0 0
      %812 = vmatpush1.bf16.msra.mxu0 0
      %813 = vmatprep.subr.bf16.mxu0 0
      %814 = vmatpush1.bf16.msra.mxu0 0
      %815 = vmatprep.subr.bf16.mxu0 0
      %816 = vmatpush1.bf16.msra.mxu0 0
      %817 = vmatprep.subr.bf16.mxu0 0
      %818 = vmatpush1.bf16.msra.mxu0 0
      %819 = vmatprep.subr.bf16.mxu0 0
      %820 = vmatpush1.bf16.msra.mxu0 0
      %821 = vmatprep.subr.bf16.mxu0 0
      %822 = vmatpush1.bf16.msra.mxu0 0
      %823 = vmatprep.subr.bf16.mxu0 0
      %824 = vmatpush1.bf16.msra.mxu0 0
      %825 = vmatprep.subr.bf16.mxu0 0
      %826 = vmatpush1.bf16.msra.mxu0 0
      %827 = vmatprep.mubr.bf16.mxu0 0
      %828 = vmatmul.mubr.bf16.gmra.mrb[0].mxu0 %v793
      %v829 = vpop.f32.mrb[0].mxu0
      %v830 = vadd.f32 0.0, %v829
      %v831 = vpop.f32.mrb[0].mxu0
      %v832 = vpop.f32.mrb[0].mxu0
      %v833 = vpop.f32.mrb[0].mxu0
      %834 = vdwg.mxu0
      %v835 = vadd.f32 %v787, %v830
      %v836 = vadd.f32 %v835, %v384
      %v837 = vtanh.pop %v836
      %v838 = vadd.f32 %v837, 1.0
      %v839 = vmul.f32 %v838, %v775
      %841 = vrot.lane.b32.xlu0 %v837, 64
      %v842 = vpop.permute.xlu0 %841
      %v844 = vmul.f32 %v838, %v842
      %846 = vrot.lane.b32.xlu0 %v844, 32
      %v847 = vpop.permute.xlu0 %846
      %v849 = vadd.f32 %v839, %v847
      %v850 = vmul.f32 %v849, 0.5
      %v851 = vmul.f32 %v838, 0.5
      %v852 = vtanh.pop %v850
      %854 = vrot.lane.b32.xlu0 %v852, 64
      %v855 = vpop.permute.xlu0 %854
      %v857 = vmul.f32 %v851, %v855
      %858 = vset.pattern.permute.xlu0 7
      %859 = vperm.xlu0 %858, %v304
      %v860 = vpop.permute.xlu0 %859
      %v862 = vmul.f32 %v860, %v320
      %v863 = vpack.c.bf16 %v857, %v857
      %865 = vrot.lane.b32.xlu0 %v863, 32
      %v866 = vpop.permute.xlu0 %865
      %v868 = vsel %vm335, %v866, 0
      %870 = vmatprep.subr.bf16.mxu0 0
      %871 = vmatpush1.bf16.msra.mxu0 %v331
      %872 = vmatprep.subr.bf16.mxu0 0
      %873 = vmatpush1.bf16.msra.mxu0 %v332
      %874 = vmatprep.subr.bf16.mxu0 0
      %875 = vmatpush1.bf16.msra.mxu0 0
      %876 = vmatprep.subr.bf16.mxu0 0
      %877 = vmatpush1.bf16.msra.mxu0 0
      %878 = vmatprep.subr.bf16.mxu0 0
      %879 = vmatpush1.bf16.msra.mxu0 0
      %880 = vmatprep.subr.bf16.mxu0 0
      %881 = vmatpush1.bf16.msra.mxu0 0
      %882 = vmatprep.subr.bf16.mxu0 0
      %883 = vmatpush1.bf16.msra.mxu0 0
      %884 = vmatprep.subr.bf16.mxu0 0
      %885 = vmatpush1.bf16.msra.mxu0 0
      %886 = vmatprep.subr.bf16.mxu0 0
      %887 = vmatpush1.bf16.msra.mxu0 0
      %888 = vmatprep.subr.bf16.mxu0 0
      %889 = vmatpush1.bf16.msra.mxu0 0
      %890 = vmatprep.subr.bf16.mxu0 0
      %891 = vmatpush1.bf16.msra.mxu0 0
      %892 = vmatprep.subr.bf16.mxu0 0
      %893 = vmatpush1.bf16.msra.mxu0 0
      %894 = vmatprep.subr.bf16.mxu0 0
      %895 = vmatpush1.bf16.msra.mxu0 0
      %896 = vmatprep.subr.bf16.mxu0 0
      %897 = vmatpush1.bf16.msra.mxu0 0
      %898 = vmatprep.subr.bf16.mxu0 0
      %899 = vmatpush1.bf16.msra.mxu0 0
      %900 = vmatprep.subr.bf16.mxu0 0
      %901 = vmatpush1.bf16.msra.mxu0 0
      %902 = vmatprep.mubr.bf16.mxu0 0
      %903 = vmatmul.mubr.bf16.gmra.mrb[0].mxu0 %v868
      %v904 = vpop.f32.mrb[0].mxu0
      %v905 = vadd.f32 0.0, %v904
      %v906 = vpop.f32.mrb[0].mxu0
      %v907 = vpop.f32.mrb[0].mxu0
      %v908 = vpop.f32.mrb[0].mxu0
      %909 = vdwg.mxu0
      %v910 = vadd.f32 %v862, %v905
      %v911 = vadd.f32 %v910, %v384
      %v912 = vtanh.pop %v911
      %v913 = vadd.f32 %v912, 1.0
      %v914 = vmul.f32 %v913, %v850
      %916 = vrot.lane.b32.xlu0 %v912, 64
      %v917 = vpop.permute.xlu0 %916
      %v919 = vmul.f32 %v913, %v917
      %921 = vrot.lane.b32.xlu0 %v919, 32
      %v922 = vpop.permute.xlu0 %921
      %v924 = vadd.f32 %v914, %v922
      %v925 = vmul.f32 %v924, 0.5
      %v926 = vmul.f32 %v913, 0.5
      %v927 = vtanh.pop %v925
      %929 = vrot.lane.b32.xlu0 %v927, 64
      %v930 = vpop.permute.xlu0 %929
      %v932 = vmul.f32 %v926, %v930
      %v933 = vld [vmem:[%s4] sm:$0xff]
      %v934 = vld [vmem:[%s4 + $0x8] sm:$0xff]
      %v935 = vld [vmem:[%s4 + $0x10] sm:$0xff]
      %v936 = vld [vmem:[%s4 + $0x18] sm:$0xff]
      %v937 = vld [vmem:[%s5] sm:$0x1]
      %v939 = vlaneseq
      %v940 = vshrl.u32 %v939, 7
      %v941 = vsub.s32 0, %v940
      %v942 = vrot.slane %v937, %v941
      %945 = vrot.lane.b32.xlu0 %v932, 32
      %v946 = vpop.permute.xlu0 %945
      %v947 = vsel %vm335, %v946, 0
      %949 = vmatprep.subr.mxu0 0.0
      %950 = vmatpush1.msra.mxu0 %v933
      %951 = vmatprep.subr.mxu0 0.0
      %952 = vmatpush1.msra.mxu0 %v934
      %953 = vmatprep.subr.mxu0 0.0
      %954 = vmatpush1.msra.mxu0 %v935
      %955 = vmatprep.subr.mxu0 0.0
      %956 = vmatpush1.msra.mxu0 %v936
      %957 = vmatprep.subr.mxu0 0.0
      %958 = vmatpush1.msra.mxu0 0.0
      %959 = vmatprep.subr.mxu0 0.0
      %960 = vmatpush1.msra.mxu0 0.0
      %961 = vmatprep.subr.mxu0 0.0
      %962 = vmatpush1.msra.mxu0 0.0
      %963 = vmatprep.subr.mxu0 0.0
      %964 = vmatpush1.msra.mxu0 0.0
      %965 = vmatprep.subr.mxu0 0.0
      %966 = vmatpush1.msra.mxu0 0.0
      %967 = vmatprep.subr.mxu0 0.0
      %968 = vmatpush1.msra.mxu0 0.0
      %969 = vmatprep.subr.mxu0 0.0
      %970 = vmatpush1.msra.mxu0 0.0
      %971 = vmatprep.subr.mxu0 0.0
      %972 = vmatpush1.msra.mxu0 0.0
      %973 = vmatprep.subr.mxu0 0.0
      %974 = vmatpush1.msra.mxu0 0.0
      %975 = vmatprep.subr.mxu0 0.0
      %976 = vmatpush1.msra.mxu0 0.0
      %977 = vmatprep.subr.mxu0 0.0
      %978 = vmatpush1.msra.mxu0 0.0
      %979 = vmatprep.subr.mxu0 0.0
      %980 = vmatpush1.msra.mxu0 0.0
      %981 = vmatprep.subr.mxu0 0.0
      %982 = vmatpush1.msra.mxu0 0.0
      %983 = vmatprep.subr.mxu0 0.0
      %984 = vmatpush1.msra.mxu0 0.0
      %985 = vmatprep.subr.mxu0 0.0
      %986 = vmatpush1.msra.mxu0 0.0
      %987 = vmatprep.subr.mxu0 0.0
      %988 = vmatpush1.msra.mxu0 0.0
      %989 = vmatprep.subr.mxu0 0.0
      %990 = vmatpush1.msra.mxu0 0.0
      %991 = vmatprep.subr.mxu0 0.0
      %992 = vmatpush1.msra.mxu0 0.0
      %993 = vmatprep.subr.mxu0 0.0
      %994 = vmatpush1.msra.mxu0 0.0
      %995 = vmatprep.subr.mxu0 0.0
      %996 = vmatpush1.msra.mxu0 0.0
      %997 = vmatprep.subr.mxu0 0.0
      %998 = vmatpush1.msra.mxu0 0.0
      %999 = vmatprep.subr.mxu0 0.0
      %1000 = vmatpush1.msra.mxu0 0.0
      %1001 = vmatprep.subr.mxu0 0.0
      %1002 = vmatpush1.msra.mxu0 0.0
      %1003 = vmatprep.subr.mxu0 0.0
      %1004 = vmatpush1.msra.mxu0 0.0
      %1005 = vmatprep.subr.mxu0 0.0
      %1006 = vmatpush1.msra.mxu0 0.0
      %1007 = vmatprep.subr.mxu0 0.0
      %1008 = vmatpush1.msra.mxu0 0.0
      %1009 = vmatprep.subr.mxu0 0.0
      %1010 = vmatpush1.msra.mxu0 0.0
      %1011 = vmatprep.subr.mxu0 0.0
      %1012 = vmatpush1.msra.mxu0 0.0
      %1013 = vmatprep.mubr.f32.mxu0 0.0
      %1014 = vmatmul.mubr.f32.gmra.mrb[0].mxu0 %v947
      %v1015 = vpop.f32.mrb[0].mxu0
      %v1016 = vadd.f32 %v942, %v1015
      %v1017 = vpop.f32.mrb[0].mxu0
      %1018 = vdwg.mxu0
      %v1019 = vmax.f32 %v1016, 0.0
      %v1020 = vld [vmem:[%s6] sm:$0xff]
      %v1021 = vld [vmem:[%s6 + $0x8] sm:$0x3]
      %v1022 = vld [vmem:[#allocation2] sm:$0x1]
      %v1024 = vlaneseq
      %v1025 = vshrl.u32 %v1024, 7
      %v1026 = vsub.s32 0, %v1025
      %v1027 = vrot.slane %v1022, %v1026
      %vm1029 = vcmask 80896
      %v1031 = vsel %vm1029, %v1019, 0
      %vm1033 = vcmask 1041408
      %v1035 = vsel %vm1033, %v1021, 0
      %1037 = vmatprep.subr.mxu0 0.0
      %1038 = vmatpush1.msra.mxu0 %v1020
      %1039 = vmatprep.subr.mxu0 0.0
      %1040 = vmatpush1.msra.mxu0 %v1035
      %1041 = vmatprep.subr.mxu0 0.0
      %1042 = vmatpush1.msra.mxu0 0.0
      %1043 = vmatprep.subr.mxu0 0.0
      %1044 = vmatpush1.msra.mxu0 0.0
      %1045 = vmatprep.subr.mxu0 0.0
      %1046 = vmatpush1.msra.mxu0 0.0
      %1047 = vmatprep.subr.mxu0 0.0
      %1048 = vmatpush1.msra.mxu0 0.0
      %1049 = vmatprep.subr.mxu0 0.0
      %1050 = vmatpush1.msra.mxu0 0.0
      %1051 = vmatprep.subr.mxu0 0.0
      %1052 = vmatpush1.msra.mxu0 0.0
      %1053 = vmatprep.subr.mxu0 0.0
      %1054 = vmatpush1.msra.mxu0 0.0
      %1055 = vmatprep.subr.mxu0 0.0
      %1056 = vmatpush1.msra.mxu0 0.0
      %1057 = vmatprep.subr.mxu0 0.0
      %1058 = vmatpush1.msra.mxu0 0.0
      %1059 = vmatprep.subr.mxu0 0.0
      %1060 = vmatpush1.msra.mxu0 0.0
      %1061 = vmatprep.subr.mxu0 0.0
      %1062 = vmatpush1.msra.mxu0 0.0
      %1063 = vmatprep.subr.mxu0 0.0
      %1064 = vmatpush1.msra.mxu0 0.0
      %1065 = vmatprep.subr.mxu0 0.0
      %1066 = vmatpush1.msra.mxu0 0.0
      %1067 = vmatprep.subr.mxu0 0.0
      %1068 = vmatpush1.msra.mxu0 0.0
      %1069 = vmatprep.subr.mxu0 0.0
      %1070 = vmatpush1.msra.mxu0 0.0
      %1071 = vmatprep.subr.mxu0 0.0
      %1072 = vmatpush1.msra.mxu0 0.0
      %1073 = vmatprep.subr.mxu0 0.0
      %1074 = vmatpush1.msra.mxu0 0.0
      %1075 = vmatprep.subr.mxu0 0.0
      %1076 = vmatpush1.msra.mxu0 0.0
      %1077 = vmatprep.subr.mxu0 0.0
      %1078 = vmatpush1.msra.mxu0 0.0
      %1079 = vmatprep.subr.mxu0 0.0
      %1080 = vmatpush1.msra.mxu0 0.0
      %1081 = vmatprep.subr.mxu0 0.0
      %1082 = vmatpush1.msra.mxu0 0.0
      %1083 = vmatprep.subr.mxu0 0.0
      %1084 = vmatpush1.msra.mxu0 0.0
      %1085 = vmatprep.subr.mxu0 0.0
      %1086 = vmatpush1.msra.mxu0 0.0
      %1087 = vmatprep.subr.mxu0 0.0
      %1088 = vmatpush1.msra.mxu0 0.0
      %1089 = vmatprep.subr.mxu0 0.0
      %1090 = vmatpush1.msra.mxu0 0.0
      %1091 = vmatprep.subr.mxu0 0.0
      %1092 = vmatpush1.msra.mxu0 0.0
      %1093 = vmatprep.subr.mxu0 0.0
      %1094 = vmatpush1.msra.mxu0 0.0
      %1095 = vmatprep.subr.mxu0 0.0
      %1096 = vmatpush1.msra.mxu0 0.0
      %1097 = vmatprep.subr.mxu0 0.0
      %1098 = vmatpush1.msra.mxu0 0.0
      %1099 = vmatprep.subr.mxu0 0.0
      %1100 = vmatpush1.msra.mxu0 0.0
      %1101 = vmatprep.mubr.f32.mxu0 0.0
      %1102 = vmatmul.mubr.f32.gmra.mrb[0].mxu0 %v1031
      %v1103 = vpop.f32.mrb[0].mxu0
      %v1104 = vadd.f32 %v1027, %v1103
      %v1105 = vpop.f32.mrb[0].mxu0
      %1106 = vdwg.mxu0
      %v1107 = vxor.u32 %v1104, 2147483648
      %v1108 = vmul.f32 %v1107, 1.442695
      %v1109 = vpow.pop %v1108
      %v1110 = vadd.f32 %v1109, 1.0
      %v1111 = vrcp.pop %v1110
      %v1112 = vmul.f32 1.0, %v1111
      %vm1113 = vcmask 7168
      %1114 = vst.msk [vmem:[%s302] sm:$0xff] %vm1113, %v1112
      %p1115 = scmp.lt.s32.totalorder %s21, 1
      %s1116 = scalar_select %p1115, %s21, 1
      %s1117 = smul.addr %s1116, 8
      %s1118 = scalar_lea.vmem %s8, %s1117
      // Predicated region
      $region53: #{dnet_forward.1} parent=51 // pred_check
        %p1119 = pneg %p212
      $region54: #{dnet_forward.1} parent=51 // pred_check_branch
        %1121 = sbr.rel (%p1119) target = $region56
      $region55: #{dnet_forward.1} parent=51 // pred_region
        _
      $region56: #{dnet_forward.1} parent=51 // pred_fallthru
        _
    $region52: #{dnet_forward.1} parent=5 // pred_fallthru
      _
    %p1122 = scmp.le.s32.totalorder 2, %s16
    // Predicated region
    $region57: #{dnet_forward.1} parent=5 // pred_check
      %p1123 = pneg %p1122
    $region58: #{dnet_forward.1} parent=5 // pred_check_branch
      %1125 = sbr.rel (%p1123) target = $region60
    $region59: #{dnet_forward.1} parent=5 // pred_region
      %s1126 = ssub.s32 %s16, 2
      // Predicated region
      $region61: #{dnet_forward.1} parent=59 // pred_check
        %p1127 = pneg %p218
      $region62: #{dnet_forward.1} parent=59 // pred_check_branch
        %1129 = sbr.rel (%p1127) target = $region64
      $region63: #{dnet_forward.1} parent=59 // pred_region
        %p1130 = scmp.lt.s32.totalorder %s22, 1
        %s1131 = scalar_select %p1130, %s22, 1
        %s1132 = smul.addr %s1131, 8
        %s1133 = scalar_lea.vmem %s8, %s1132
      $region64: #{dnet_forward.1} parent=59 // pred_fallthru
        _
    $region60: #{dnet_forward.1} parent=5 // pred_fallthru
      _
  $region6: #{dnet_forward.1} parent=0 // loop_footer
    %s20 = sadd.s32 1, %s16
  $region7: #{dnet_forward.1} parent=0 // loop_footer_branch
    %15 = sbr.rel target = $region3
  $region8: #{dnet_forward.1} parent=0 // loop_exit
    _

</llo_original>
